<compile_context>
chip_gen: v7x
topology: tpu7x:2x2x1
jax: 0.10.0
libtpu: 0.0.40
codegen_flags: <defaults>
</compile_context>

<pallas_src>
import functools
import math

import jax
import jax.numpy as jnp
import numpy as np
from jax.experimental import pallas as pl
from jax.experimental.pallas import tpu as pltpu

NEG_SLOPE = 1.0           # nn.LeakyReLU(True) -> negative_slope = True == 1.0 (identity)
MM_DTYPE = jnp.float32    # flip to jnp.bfloat16 at production d_model (f32 accumulation kept)
MASK_NEG = -1e9           # additive mask value for cross-batch (query, key) pairs


# ----------------------------- kernel helpers ------------------------------- #

def _mm(a, b):
    """2-D MXU matmul, f32 accumulation."""
    return jnp.dot(a.astype(MM_DTYPE), b.astype(MM_DTYPE),
                   preferred_element_type=jnp.float32)


# ------------------------------- Pallas kernel ------------------------------- #

def _decoder_layer_kernel(nhead,
                          tgt_ref, mem_ref, smask_ref, xmask_ref,
                          qkv_w_ref, qkv_b_ref, out_w_ref, out_b_ref,
                          w1_ref, b1_ref, w2_ref, b2_ref, out_ref):
    R, E = tgt_ref.shape          # R = L*N rows, batch interleaved (l-major, n-minor)
    H = nhead
    hd = E // H

    t2d = tgt_ref[...]            # (L*N, E)
    m2d = mem_ref[...]            # (S*N, E)

    def split_heads(x2d, col0):
        """(rows, C) -> (H, rows, hd): head h = lanes [col0+h*hd, col0+(h+1)*hd)."""
        return jnp.stack([x2d[:, col0 + h * hd: col0 + (h + 1) * hd]
                          for h in range(H)], axis=0)

    def attention(q3, k3, v3, addmask, wo, bo):
        """Head-batched attention; addmask (rows_q, rows_k) keeps batches separate."""
        s = jnp.einsum('hqd,hkd->hqk', q3.astype(MM_DTYPE), k3.astype(MM_DTYPE),
                       preferred_element_type=jnp.float32)      # (H, Rq, Rk)
        s = s + addmask                                          # -1e9 on cross-batch pairs
        s = s - jnp.max(s, axis=-1, keepdims=True)
        p = jnp.exp(s)                                           # masked entries underflow to 0
        o = jnp.einsum('hqk,hkd->hqd', p.astype(MM_DTYPE), v3.astype(MM_DTYPE),
                       preferred_element_type=jnp.float32)       # (H, Rq, hd)
        o = o / jnp.sum(p, axis=-1, keepdims=True)               # plain divide (perf review)
        attn = jnp.concatenate([o[h] for h in range(H)], axis=-1)  # (Rq, E)
        return _mm(attn, wo) + bo

    # -------- self-attention: fused QKV projection (q columns pre-scaled) --------
    qkv = _mm(t2d, qkv_w_ref[0]) + qkv_b_ref[0]                  # (L*N, 3E)
    t2d = t2d + attention(split_heads(qkv, 0),
                          split_heads(qkv, E),
                          split_heads(qkv, 2 * E),
                          smask_ref[...], out_w_ref[0], out_b_ref[0])   # dropout1 = id

    # -------- cross-attention: split Q (tgt) / KV (memory) projections --------
    w_ca = qkv_w_ref[1]                                          # (E, 3E) = [Wq | Wk | Wv]
    b_ca = qkv_b_ref[1]                                          # (1, 3E)
    q_p = _mm(t2d, w_ca[:, :E]) + b_ca[:, :E]                    # (L*N, E)
    kv_p = _mm(m2d, w_ca[:, E:]) + b_ca[:, E:]                   # (S*N, 2E) = [K | V]
    t2d = t2d + attention(split_heads(q_p, 0),
                          split_heads(kv_p, 0),
                          split_heads(kv_p, E),
                          xmask_ref[...], out_w_ref[1], out_b_ref[1])   # dropout2 = id

    # -------- feed-forward --------
    h1 = _mm(t2d, w1_ref[...]) + b1_ref[...]                     # (L*N, F)
    if NEG_SLOPE != 1.0:   # LeakyReLU(True): slope True == 1.0 -> identity at trace time
        h1 = jnp.where(h1 >= 0, h1, NEG_SLOPE * h1)
    t2d = t2d + (_mm(h1, w2_ref[...]) + b2_ref[...])             # dropout / dropout3 = id

    out_ref[...] = t2d.astype(out_ref.dtype)


# --------------------------- param packing & wrapper ------------------------- #

def pack_params(params, d_model, nhead):
    """One-time packing (hoisted out of the per-call path).

    Returns (qkv_w (2,E,3E), qkv_b (2,1,3E), out_w (2,E,E), out_b (2,1,E),
             w1 (E,F), b1 (1,F), w2 (F,E), b2 (1,E)); q weight/bias pre-scaled
    by 1/sqrt(head_dim)."""
    (sa_wq, sa_bq, sa_wk, sa_bk, sa_wv, sa_bv, sa_wo, sa_bo,
     ca_wq, ca_bq, ca_wk, ca_bk, ca_wv, ca_bv, ca_wo, ca_bo,
     w1, b1, w2, b2) = params
    E = d_model
    assert E % nhead == 0
    scale = 1.0 / math.sqrt(E // nhead)

    def fuse(wq, bq, wk, bk, wv, bv):
        return (jnp.concatenate([wq * scale, wk, wv], axis=1),
                jnp.concatenate([bq * scale, bk, bv], axis=1))

    sa_w, sa_b = fuse(sa_wq, sa_bq, sa_wk, sa_bk, sa_wv, sa_bv)
    ca_w, ca_b = fuse(ca_wq, ca_bq, ca_wk, ca_bk, ca_wv, ca_bv)
    f32 = lambda x: x.astype(jnp.float32)
    return (jnp.stack([sa_w, ca_w], axis=0).astype(MM_DTYPE),     # (2, E, 3E)
            jnp.stack([sa_b, ca_b], axis=0).astype(jnp.float32),  # (2, 1, 3E)
            jnp.stack([sa_wo, ca_wo], axis=0).astype(MM_DTYPE),   # (2, E, E)
            jnp.stack([sa_bo, ca_bo], axis=0).astype(jnp.float32),# (2, 1, E)
            f32(w1), f32(b1), f32(w2), f32(b2))


def _batch_masks(L, S, N):
    """Compile-time additive masks: 0 for same-batch (query, key) pairs, -1e9 otherwise."""
    qid = np.arange(L * N) % N
    kid_self = np.arange(L * N) % N
    kid_mem = np.arange(S * N) % N
    smask = np.where(qid[:, None] == kid_self[None, :], 0.0, MASK_NEG).astype(np.float32)
    xmask = np.where(qid[:, None] == kid_mem[None, :], 0.0, MASK_NEG).astype(np.float32)
    return jnp.asarray(smask), jnp.asarray(xmask)


@functools.partial(jax.jit, static_argnames=("nhead",))
def transformer_decoder_layer(tgt, memory, packed, *, nhead):
    """tgt: (L, N, E) f32, memory: (S, N, E) f32 — PyTorch seq-first layout.
    `packed` is the output of pack_params (call it once, outside the hot path)."""
    L, N, E = tgt.shape
    S = memory.shape[0]
    qkv_w, qkv_b, out_w, out_b, w1, b1, w2, b2 = packed
    F = w1.shape[1]

    # Free contiguous reshapes (no HBM transpose): fold batch into sublanes.
    t2d = tgt.reshape(L * N, E)
    m2d = memory.reshape(S * N, E)
    smask, xmask = _batch_masks(L, S, N)   # baked constants under jit

    out2d = pl.pallas_call(
        functools.partial(_decoder_layer_kernel, nhead),
        out_shape=jax.ShapeDtypeStruct((L * N, E), jnp.float32),
        grid_spec=pltpu.PrefetchScalarGridSpec(
            num_scalar_prefetch=0,
            grid=(1,),   # single fat step: per-step overhead & weight DMAs paid once
            in_specs=[
                pl.BlockSpec((L * N, E), lambda b: (0, 0)),
                pl.BlockSpec((S * N, E), lambda b: (0, 0)),
                pl.BlockSpec((L * N, L * N), lambda b: (0, 0)),
                pl.BlockSpec((L * N, S * N), lambda b: (0, 0)),
                pl.BlockSpec((2, E, 3 * E), lambda b: (0, 0, 0)),
                pl.BlockSpec((2, 1, 3 * E), lambda b: (0, 0, 0)),
                pl.BlockSpec((2, E, E), lambda b: (0, 0, 0)),
                pl.BlockSpec((2, 1, E), lambda b: (0, 0, 0)),
                pl.BlockSpec((E, F), lambda b: (0, 0)),
                pl.BlockSpec((1, F), lambda b: (0, 0)),
                pl.BlockSpec((F, E), lambda b: (0, 0)),
                pl.BlockSpec((1, E), lambda b: (0, 0)),
            ],
            out_specs=pl.BlockSpec((L * N, E), lambda b: (0, 0)),
        ),
        compiler_params=pltpu.CompilerParams(
            dimension_semantics=("arbitrary",)),
    )(t2d, m2d, smask, xmask, qkv_w, qkv_b, out_w, out_b, w1, b1, w2, b2)
    return out2d.reshape(L, N, E)


# ------------------------- params & pure-JAX reference ----------------------- #

def init_params(key, d_model, nhead, dff):
    """Deterministic synthetic weights. Linear weights stored pre-transposed
    as (in, out) so the kernel does x @ W (equivalent to PyTorch x @ W.T)."""
    ks = jax.random.split(key, 20)

    def w(k, shape):
        return jax.random.normal(k, shape, jnp.float32) * 0.1

    def b(k, dim):
        return jax.random.normal(k, (1, dim), jnp.float32) * 0.01

    E, F = d_model, dff
    return [
        w(ks[0], (E, E)), b(ks[1], E),    # sa_wq, sa_bq
        w(ks[2], (E, E)), b(ks[3], E),    # sa_wk, sa_bk
        w(ks[4], (E, E)), b(ks[5], E),    # sa_wv, sa_bv
        w(ks[6], (E, E)), b(ks[7], E),    # sa_wo, sa_bo
        w(ks[8], (E, E)), b(ks[9], E),    # ca_wq, ca_bq
        w(ks[10], (E, E)), b(ks[11], E),  # ca_wk, ca_bk
        w(ks[12], (E, E)), b(ks[13], E),  # ca_wv, ca_bv
        w(ks[14], (E, E)), b(ks[15], E),  # ca_wo, ca_bo
        w(ks[16], (E, F)), b(ks[17], F),  # w1, b1
        w(ks[18], (F, E)), b(ks[19], E),  # w2, b2
    ]


def _mha_ref(q_in, kv_in, wq, bq, wk, bk, wv, bv, wo, bo, nhead):
    L, N, E = q_in.shape
    S = kv_in.shape[0]
    hd = E // nhead
    q = (jnp.dot(q_in, wq) + bq).reshape(L, N, nhead, hd) / math.sqrt(hd)
    k = (jnp.dot(kv_in, wk) + bk).reshape(S, N, nhead, hd)
    v = (jnp.dot(kv_in, wv) + bv).reshape(S, N, nhead, hd)
    s = jnp.einsum('lnhd,snhd->nhls', q, k)
    p = jax.nn.softmax(s, axis=-1)
    o = jnp.einsum('nhls,snhd->lnhd', p, v).reshape(L, N, E)
    return jnp.dot(o, wo) + bo


def decoder_ref(tgt, memory, params, nhead):
    (sa_wq, sa_bq, sa_wk, sa_bk, sa_wv, sa_bv, sa_wo, sa_bo,
     ca_wq, ca_bq, ca_wk, ca_bk, ca_wv, ca_bv, ca_wo, ca_bo,
     w1, b1, w2, b2) = params
    t2 = _mha_ref(tgt, tgt, sa_wq, sa_bq, sa_wk, sa_bk, sa_wv, sa_bv,
                  sa_wo, sa_bo, nhead)
    tgt = tgt + t2
    t2 = _mha_ref(tgt, memory, ca_wq, ca_bq, ca_wk, ca_bk, ca_wv, ca_bv,
                  ca_wo, ca_bo, nhead)
    tgt = tgt + t2
    h = jnp.dot(tgt, w1) + b1
    h = jnp.where(h >= 0, h, NEG_SLOPE * h)
    t2 = jnp.dot(h, w2) + b2
    return tgt + t2


# ------------------------------------ main ----------------------------------- #

if __name__ == "__main__":
    d_model, nhead, dff = 32, 4, 16
    L, S, N = 8, 8, 2

    key = jax.random.PRNGKey(0)
    kp, kt, km = jax.random.split(key, 3)
    params = init_params(kp, d_model, nhead, dff)
    packed = pack_params(params, d_model, nhead)   # hoisted: packed once, not per call

    tgt = jax.random.normal(kt, (L, N, d_model), jnp.float32)
    memory = jax.random.normal(km, (S, N, d_model), jnp.float32)

    out = transformer_decoder_layer(tgt, memory, packed, nhead=nhead)
    out = jax.block_until_ready(out)

    ref = decoder_ref(tgt, memory, params, nhead)
    np.testing.assert_allclose(np.asarray(out), np.asarray(ref),
                               atol=1e-4, rtol=1e-4)
    print("KERNEL_OK")
</pallas_src>

<mosaic_0001>
module attributes {stable_mosaic.version = 11 : i64} {
  func.func @_decoder_layer_kernel(%arg0: i32, %arg1: memref<16x32xf32, #tpu.memory_space<vmem>>, %arg2: memref<16x32xf32, #tpu.memory_space<vmem>>, %arg3: memref<16x16xf32, #tpu.memory_space<vmem>>, %arg4: memref<16x16xf32, #tpu.memory_space<vmem>>, %arg5: memref<2x32x96xf32, #tpu.memory_space<vmem>>, %arg6: memref<2x1x96xf32, #tpu.memory_space<vmem>>, %arg7: memref<2x32x32xf32, #tpu.memory_space<vmem>>, %arg8: memref<2x1x32xf32, #tpu.memory_space<vmem>>, %arg9: memref<32x16xf32, #tpu.memory_space<vmem>>, %arg10: memref<1x16xf32, #tpu.memory_space<vmem>>, %arg11: memref<16x32xf32, #tpu.memory_space<vmem>>, %arg12: memref<1x32xf32, #tpu.memory_space<vmem>>, %arg13: memref<16x32xf32, #tpu.memory_space<vmem>>) attributes {dimension_semantics = [#tpu.dimension_semantics<arbitrary>], iteration_bounds = array<i64: 1>, scalar_prefetch = 0 : i64, scratch_operands = 0 : i64, tpu.core_type = #tpu.core_type<tc>, window_params = [{pipeline_mode = #tpu.pipeline_mode<synchronous>, transform_indices = @transform_0, window_bounds = array<i64: 16, 32>}, {pipeline_mode = #tpu.pipeline_mode<synchronous>, transform_indices = @transform_1, window_bounds = array<i64: 16, 32>}, {pipeline_mode = #tpu.pipeline_mode<synchronous>, transform_indices = @transform_2, window_bounds = array<i64: 16, 16>}, {pipeline_mode = #tpu.pipeline_mode<synchronous>, transform_indices = @transform_3, window_bounds = array<i64: 16, 16>}, {pipeline_mode = #tpu.pipeline_mode<synchronous>, transform_indices = @transform_4, window_bounds = array<i64: 2, 32, 96>}, {pipeline_mode = #tpu.pipeline_mode<synchronous>, transform_indices = @transform_5, window_bounds = array<i64: 2, 1, 96>}, {pipeline_mode = #tpu.pipeline_mode<synchronous>, transform_indices = @transform_6, window_bounds = array<i64: 2, 32, 32>}, {pipeline_mode = #tpu.pipeline_mode<synchronous>, transform_indices = @transform_7, window_bounds = array<i64: 2, 1, 32>}, {pipeline_mode = #tpu.pipeline_mode<synchronous>, transform_indices = @transform_8, window_bounds = array<i64: 32, 16>}, {pipeline_mode = #tpu.pipeline_mode<synchronous>, transform_indices = @transform_9, window_bounds = array<i64: 1, 16>}, {pipeline_mode = #tpu.pipeline_mode<synchronous>, transform_indices = @transform_10, window_bounds = array<i64: 16, 32>}, {pipeline_mode = #tpu.pipeline_mode<synchronous>, transform_indices = @transform_11, window_bounds = array<i64: 1, 32>}, {pipeline_mode = #tpu.pipeline_mode<synchronous>, transform_indices = @transform_12, window_bounds = array<i64: 16, 32>}]} {
    %c0 = arith.constant 0 : index
    %c0_0 = arith.constant 0 : index
    %0 = vector.load %arg1[%c0, %c0_0] : memref<16x32xf32, #tpu.memory_space<vmem>>, vector<16x32xf32>
    %c0_1 = arith.constant 0 : index
    %c0_2 = arith.constant 0 : index
    %1 = vector.load %arg2[%c0_1, %c0_2] : memref<16x32xf32, #tpu.memory_space<vmem>>, vector<16x32xf32>
    %c0_3 = arith.constant 0 : index
    %c0_4 = arith.constant 0 : index
    %c0_5 = arith.constant 0 : index
    %2 = vector.load %arg5[%c0_3, %c0_4, %c0_5] : memref<2x32x96xf32, #tpu.memory_space<vmem>>, vector<1x32x96xf32>
    %3 = vector.shape_cast %2 : vector<1x32x96xf32> to vector<32x96xf32>
    %cst = arith.constant dense<0.000000e+00> : vector<16x96xf32>
    %4 = tpu.matmul %0, %3, %cst {dimension_numbers = #tpu.dot_dimension_numbers<[1], [0], [0], [1], [0, 0, 1, 1], [], []>} : vector<16x32xf32>, vector<32x96xf32>, vector<16x96xf32> -> vector<16x96xf32>
    %c0_6 = arith.constant 0 : index
    %c0_7 = arith.constant 0 : index
    %c0_8 = arith.constant 0 : index
    %5 = vector.load %arg6[%c0_6, %c0_7, %c0_8] : memref<2x1x96xf32, #tpu.memory_space<vmem>>, vector<1x1x96xf32>
    %6 = vector.shape_cast %5 : vector<1x1x96xf32> to vector<1x96xf32>
    %7 = vector.broadcast %6 : vector<1x96xf32> to vector<16x96xf32>
    %8 = arith.addf %4, %7 : vector<16x96xf32>
    %9 = vector.extract_strided_slice %8 {offsets = [0, 0], sizes = [16, 8], strides = [1, 1]} : vector<16x96xf32> to vector<16x8xf32>
    %10 = vector.extract_strided_slice %8 {offsets = [0, 8], sizes = [16, 8], strides = [1, 1]} : vector<16x96xf32> to vector<16x8xf32>
    %11 = vector.extract_strided_slice %8 {offsets = [0, 16], sizes = [16, 8], strides = [1, 1]} : vector<16x96xf32> to vector<16x8xf32>
    %12 = vector.extract_strided_slice %8 {offsets = [0, 24], sizes = [16, 8], strides = [1, 1]} : vector<16x96xf32> to vector<16x8xf32>
    %13 = vector.shape_cast %9 : vector<16x8xf32> to vector<1x16x8xf32>
    %14 = vector.shape_cast %10 : vector<16x8xf32> to vector<1x16x8xf32>
    %15 = vector.shape_cast %11 : vector<16x8xf32> to vector<1x16x8xf32>
    %16 = vector.shape_cast %12 : vector<16x8xf32> to vector<1x16x8xf32>
    %17 = tpu.concatenate %13, %14, %15, %16 in 0 : vector<1x16x8xf32>, vector<1x16x8xf32>, vector<1x16x8xf32>, vector<1x16x8xf32> -> vector<4x16x8xf32>
    %18 = vector.extract_strided_slice %8 {offsets = [0, 32], sizes = [16, 8], strides = [1, 1]} : vector<16x96xf32> to vector<16x8xf32>
    %19 = vector.extract_strided_slice %8 {offsets = [0, 40], sizes = [16, 8], strides = [1, 1]} : vector<16x96xf32> to vector<16x8xf32>
    %20 = vector.extract_strided_slice %8 {offsets = [0, 48], sizes = [16, 8], strides = [1, 1]} : vector<16x96xf32> to vector<16x8xf32>
    %21 = vector.extract_strided_slice %8 {offsets = [0, 56], sizes = [16, 8], strides = [1, 1]} : vector<16x96xf32> to vector<16x8xf32>
    %22 = vector.shape_cast %18 : vector<16x8xf32> to vector<1x16x8xf32>
    %23 = vector.shape_cast %19 : vector<16x8xf32> to vector<1x16x8xf32>
    %24 = vector.shape_cast %20 : vector<16x8xf32> to vector<1x16x8xf32>
    %25 = vector.shape_cast %21 : vector<16x8xf32> to vector<1x16x8xf32>
    %26 = tpu.concatenate %22, %23, %24, %25 in 0 : vector<1x16x8xf32>, vector<1x16x8xf32>, vector<1x16x8xf32>, vector<1x16x8xf32> -> vector<4x16x8xf32>
    %27 = vector.extract_strided_slice %8 {offsets = [0, 64], sizes = [16, 8], strides = [1, 1]} : vector<16x96xf32> to vector<16x8xf32>
    %28 = vector.extract_strided_slice %8 {offsets = [0, 72], sizes = [16, 8], strides = [1, 1]} : vector<16x96xf32> to vector<16x8xf32>
    %29 = vector.extract_strided_slice %8 {offsets = [0, 80], sizes = [16, 8], strides = [1, 1]} : vector<16x96xf32> to vector<16x8xf32>
    %30 = vector.extract_strided_slice %8 {offsets = [0, 88], sizes = [16, 8], strides = [1, 1]} : vector<16x96xf32> to vector<16x8xf32>
    %31 = vector.shape_cast %27 : vector<16x8xf32> to vector<1x16x8xf32>
    %32 = vector.shape_cast %28 : vector<16x8xf32> to vector<1x16x8xf32>
    %33 = vector.shape_cast %29 : vector<16x8xf32> to vector<1x16x8xf32>
    %34 = vector.shape_cast %30 : vector<16x8xf32> to vector<1x16x8xf32>
    %35 = tpu.concatenate %31, %32, %33, %34 in 0 : vector<1x16x8xf32>, vector<1x16x8xf32>, vector<1x16x8xf32>, vector<1x16x8xf32> -> vector<4x16x8xf32>
    %c0_9 = arith.constant 0 : index
    %c0_10 = arith.constant 0 : index
    %36 = vector.load %arg3[%c0_9, %c0_10] : memref<16x16xf32, #tpu.memory_space<vmem>>, vector<16x16xf32>
    %c0_11 = arith.constant 0 : index
    %c0_12 = arith.constant 0 : index
    %c0_13 = arith.constant 0 : index
    %37 = vector.load %arg7[%c0_11, %c0_12, %c0_13] : memref<2x32x32xf32, #tpu.memory_space<vmem>>, vector<1x32x32xf32>
    %38 = vector.shape_cast %37 : vector<1x32x32xf32> to vector<32x32xf32>
    %c0_14 = arith.constant 0 : index
    %c0_15 = arith.constant 0 : index
    %c0_16 = arith.constant 0 : index
    %39 = vector.load %arg8[%c0_14, %c0_15, %c0_16] : memref<2x1x32xf32, #tpu.memory_space<vmem>>, vector<1x1x32xf32>
    %40 = vector.shape_cast %39 : vector<1x1x32xf32> to vector<1x32xf32>
    "tpu.trace_start"() <{level = 10 : i32, message = "hqd,hkd->hqk"}> : () -> ()
    %cst_17 = arith.constant dense<0.000000e+00> : vector<4x16x16xf32>
    %41 = tpu.matmul %17, %26, %cst_17 {dimension_numbers = #tpu.dot_dimension_numbers<[2], [2], [1], [1], [0, 0, 0, 1, 1, 1], [0], [0]>} : vector<4x16x8xf32>, vector<4x16x8xf32>, vector<4x16x16xf32> -> vector<4x16x16xf32>
    "tpu.trace_stop"() : () -> ()
    %42 = vector.shape_cast %36 : vector<16x16xf32> to vector<1x16x16xf32>
    %43 = vector.broadcast %42 : vector<1x16x16xf32> to vector<4x16x16xf32>
    %44 = arith.addf %41, %43 : vector<4x16x16xf32>
    %cst_18 = arith.constant dense<0xFF800000> : vector<4x16xf32>
    %45 = vector.multi_reduction <maximumf>, %44, %cst_18 [2] : vector<4x16x16xf32> to vector<4x16xf32>
    %46 = vector.shape_cast %45 : vector<4x16xf32> to vector<4x16x1xf32>
    %47 = vector.broadcast %46 : vector<4x16x1xf32> to vector<4x16x16xf32>
    %48 = arith.subf %44, %47 : vector<4x16x16xf32>
    %49 = math.exp %48 : vector<4x16x16xf32>
    "tpu.trace_start"() <{level = 10 : i32, message = "hqk,hkd->hqd"}> : () -> ()
    %cst_19 = arith.constant dense<0.000000e+00> : vector<4x16x8xf32>
    %50 = tpu.matmul %49, %35, %cst_19 {dimension_numbers = #tpu.dot_dimension_numbers<[2], [1], [1], [2], [0, 0, 0, 1, 1, 2], [0], [0]>} : vector<4x16x16xf32>, vector<4x16x8xf32>, vector<4x16x8xf32> -> vector<4x16x8xf32>
    "tpu.trace_stop"() : () -> ()
    %cst_20 = arith.constant dense<0.000000e+00> : vector<4x16xf32>
    %51 = vector.multi_reduction <add>, %49, %cst_20 [2] : vector<4x16x16xf32> to vector<4x16xf32>
    %52 = vector.shape_cast %51 : vector<4x16xf32> to vector<4x16x1xf32>
    %53 = vector.broadcast %52 : vector<4x16x1xf32> to vector<4x16x8xf32>
    %54 = arith.divf %50, %53 : vector<4x16x8xf32>
    %55 = vector.extract_strided_slice %54 {offsets = [0, 0, 0], sizes = [1, 16, 8], strides = [1, 1, 1]} : vector<4x16x8xf32> to vector<1x16x8xf32>
    %56 = vector.shape_cast %55 : vector<1x16x8xf32> to vector<16x8xf32>
    %57 = vector.extract_strided_slice %54 {offsets = [1, 0, 0], sizes = [1, 16, 8], strides = [1, 1, 1]} : vector<4x16x8xf32> to vector<1x16x8xf32>
    %58 = vector.shape_cast %57 : vector<1x16x8xf32> to vector<16x8xf32>
    %59 = vector.extract_strided_slice %54 {offsets = [2, 0, 0], sizes = [1, 16, 8], strides = [1, 1, 1]} : vector<4x16x8xf32> to vector<1x16x8xf32>
    %60 = vector.shape_cast %59 : vector<1x16x8xf32> to vector<16x8xf32>
    %61 = vector.extract_strided_slice %54 {offsets = [3, 0, 0], sizes = [1, 16, 8], strides = [1, 1, 1]} : vector<4x16x8xf32> to vector<1x16x8xf32>
    %62 = vector.shape_cast %61 : vector<1x16x8xf32> to vector<16x8xf32>
    %63 = tpu.concatenate %56, %58, %60, %62 in 1 : vector<16x8xf32>, vector<16x8xf32>, vector<16x8xf32>, vector<16x8xf32> -> vector<16x32xf32>
    %cst_21 = arith.constant dense<0.000000e+00> : vector<16x32xf32>
    %64 = tpu.matmul %63, %38, %cst_21 {dimension_numbers = #tpu.dot_dimension_numbers<[1], [0], [0], [1], [0, 0, 1, 1], [], []>} : vector<16x32xf32>, vector<32x32xf32>, vector<16x32xf32> -> vector<16x32xf32>
    %65 = vector.broadcast %40 : vector<1x32xf32> to vector<16x32xf32>
    %66 = arith.addf %64, %65 : vector<16x32xf32>
    %67 = arith.addf %0, %66 : vector<16x32xf32>
    %c1 = arith.constant 1 : index
    %c0_22 = arith.constant 0 : index
    %c0_23 = arith.constant 0 : index
    %68 = vector.load %arg5[%c1, %c0_22, %c0_23] : memref<2x32x96xf32, #tpu.memory_space<vmem>>, vector<1x32x96xf32>
    %69 = vector.shape_cast %68 : vector<1x32x96xf32> to vector<32x96xf32>
    %c1_24 = arith.constant 1 : index
    %c0_25 = arith.constant 0 : index
    %c0_26 = arith.constant 0 : index
    %70 = vector.load %arg6[%c1_24, %c0_25, %c0_26] : memref<2x1x96xf32, #tpu.memory_space<vmem>>, vector<1x1x96xf32>
    %71 = vector.shape_cast %70 : vector<1x1x96xf32> to vector<1x96xf32>
    %72 = vector.extract_strided_slice %69 {offsets = [0, 0], sizes = [32, 32], strides = [1, 1]} : vector<32x96xf32> to vector<32x32xf32>
    %cst_27 = arith.constant dense<0.000000e+00> : vector<16x32xf32>
    %73 = tpu.matmul %67, %72, %cst_27 {dimension_numbers = #tpu.dot_dimension_numbers<[1], [0], [0], [1], [0, 0, 1, 1], [], []>} : vector<16x32xf32>, vector<32x32xf32>, vector<16x32xf32> -> vector<16x32xf32>
    %74 = vector.extract_strided_slice %71 {offsets = [0, 0], sizes = [1, 32], strides = [1, 1]} : vector<1x96xf32> to vector<1x32xf32>
    %75 = vector.broadcast %74 : vector<1x32xf32> to vector<16x32xf32>
    %76 = arith.addf %73, %75 : vector<16x32xf32>
    %77 = vector.extract_strided_slice %69 {offsets = [0, 32], sizes = [32, 64], strides = [1, 1]} : vector<32x96xf32> to vector<32x64xf32>
    %cst_28 = arith.constant dense<0.000000e+00> : vector<16x64xf32>
    %78 = tpu.matmul %1, %77, %cst_28 {dimension_numbers = #tpu.dot_dimension_numbers<[1], [0], [0], [1], [0, 0, 1, 1], [], []>} : vector<16x32xf32>, vector<32x64xf32>, vector<16x64xf32> -> vector<16x64xf32>
    %79 = vector.extract_strided_slice %71 {offsets = [0, 32], sizes = [1, 64], strides = [1, 1]} : vector<1x96xf32> to vector<1x64xf32>
    %80 = vector.broadcast %79 : vector<1x64xf32> to vector<16x64xf32>
    %81 = arith.addf %78, %80 : vector<16x64xf32>
    %82 = vector.extract_strided_slice %76 {offsets = [0, 0], sizes = [16, 8], strides = [1, 1]} : vector<16x32xf32> to vector<16x8xf32>
    %83 = vector.extract_strided_slice %76 {offsets = [0, 8], sizes = [16, 8], strides = [1, 1]} : vector<16x32xf32> to vector<16x8xf32>
    %84 = vector.extract_strided_slice %76 {offsets = [0, 16], sizes = [16, 8], strides = [1, 1]} : vector<16x32xf32> to vector<16x8xf32>
    %85 = vector.extract_strided_slice %76 {offsets = [0, 24], sizes = [16, 8], strides = [1, 1]} : vector<16x32xf32> to vector<16x8xf32>
    %86 = vector.shape_cast %82 : vector<16x8xf32> to vector<1x16x8xf32>
    %87 = vector.shape_cast %83 : vector<16x8xf32> to vector<1x16x8xf32>
    %88 = vector.shape_cast %84 : vector<16x8xf32> to vector<1x16x8xf32>
    %89 = vector.shape_cast %85 : vector<16x8xf32> to vector<1x16x8xf32>
    %90 = tpu.concatenate %86, %87, %88, %89 in 0 : vector<1x16x8xf32>, vector<1x16x8xf32>, vector<1x16x8xf32>, vector<1x16x8xf32> -> vector<4x16x8xf32>
    %91 = vector.extract_strided_slice %81 {offsets = [0, 0], sizes = [16, 8], strides = [1, 1]} : vector<16x64xf32> to vector<16x8xf32>
    %92 = vector.extract_strided_slice %81 {offsets = [0, 8], sizes = [16, 8], strides = [1, 1]} : vector<16x64xf32> to vector<16x8xf32>
    %93 = vector.extract_strided_slice %81 {offsets = [0, 16], sizes = [16, 8], strides = [1, 1]} : vector<16x64xf32> to vector<16x8xf32>
    %94 = vector.extract_strided_slice %81 {offsets = [0, 24], sizes = [16, 8], strides = [1, 1]} : vector<16x64xf32> to vector<16x8xf32>
    %95 = vector.shape_cast %91 : vector<16x8xf32> to vector<1x16x8xf32>
    %96 = vector.shape_cast %92 : vector<16x8xf32> to vector<1x16x8xf32>
    %97 = vector.shape_cast %93 : vector<16x8xf32> to vector<1x16x8xf32>
    %98 = vector.shape_cast %94 : vector<16x8xf32> to vector<1x16x8xf32>
    %99 = tpu.concatenate %95, %96, %97, %98 in 0 : vector<1x16x8xf32>, vector<1x16x8xf32>, vector<1x16x8xf32>, vector<1x16x8xf32> -> vector<4x16x8xf32>
    %100 = vector.extract_strided_slice %81 {offsets = [0, 32], sizes = [16, 8], strides = [1, 1]} : vector<16x64xf32> to vector<16x8xf32>
    %101 = vector.extract_strided_slice %81 {offsets = [0, 40], sizes = [16, 8], strides = [1, 1]} : vector<16x64xf32> to vector<16x8xf32>
    %102 = vector.extract_strided_slice %81 {offsets = [0, 48], sizes = [16, 8], strides = [1, 1]} : vector<16x64xf32> to vector<16x8xf32>
    %103 = vector.extract_strided_slice %81 {offsets = [0, 56], sizes = [16, 8], strides = [1, 1]} : vector<16x64xf32> to vector<16x8xf32>
    %104 = vector.shape_cast %100 : vector<16x8xf32> to vector<1x16x8xf32>
    %105 = vector.shape_cast %101 : vector<16x8xf32> to vector<1x16x8xf32>
    %106 = vector.shape_cast %102 : vector<16x8xf32> to vector<1x16x8xf32>
    %107 = vector.shape_cast %103 : vector<16x8xf32> to vector<1x16x8xf32>
    %108 = tpu.concatenate %104, %105, %106, %107 in 0 : vector<1x16x8xf32>, vector<1x16x8xf32>, vector<1x16x8xf32>, vector<1x16x8xf32> -> vector<4x16x8xf32>
    %c0_29 = arith.constant 0 : index
    %c0_30 = arith.constant 0 : index
    %109 = vector.load %arg4[%c0_29, %c0_30] : memref<16x16xf32, #tpu.memory_space<vmem>>, vector<16x16xf32>
    %c1_31 = arith.constant 1 : index
    %c0_32 = arith.constant 0 : index
    %c0_33 = arith.constant 0 : index
    %110 = vector.load %arg7[%c1_31, %c0_32, %c0_33] : memref<2x32x32xf32, #tpu.memory_space<vmem>>, vector<1x32x32xf32>
    %111 = vector.shape_cast %110 : vector<1x32x32xf32> to vector<32x32xf32>
    %c1_34 = arith.constant 1 : index
    %c0_35 = arith.constant 0 : index
    %c0_36 = arith.constant 0 : index
    %112 = vector.load %arg8[%c1_34, %c0_35, %c0_36] : memref<2x1x32xf32, #tpu.memory_space<vmem>>, vector<1x1x32xf32>
    %113 = vector.shape_cast %112 : vector<1x1x32xf32> to vector<1x32xf32>
    "tpu.trace_start"() <{level = 10 : i32, message = "hqd,hkd->hqk"}> : () -> ()
    %cst_37 = arith.constant dense<0.000000e+00> : vector<4x16x16xf32>
    %114 = tpu.matmul %90, %99, %cst_37 {dimension_numbers = #tpu.dot_dimension_numbers<[2], [2], [1], [1], [0, 0, 0, 1, 1, 1], [0], [0]>} : vector<4x16x8xf32>, vector<4x16x8xf32>, vector<4x16x16xf32> -> vector<4x16x16xf32>
    "tpu.trace_stop"() : () -> ()
    %115 = vector.shape_cast %109 : vector<16x16xf32> to vector<1x16x16xf32>
    %116 = vector.broadcast %115 : vector<1x16x16xf32> to vector<4x16x16xf32>
    %117 = arith.addf %114, %116 : vector<4x16x16xf32>
    %cst_38 = arith.constant dense<0xFF800000> : vector<4x16xf32>
    %118 = vector.multi_reduction <maximumf>, %117, %cst_38 [2] : vector<4x16x16xf32> to vector<4x16xf32>
    %119 = vector.shape_cast %118 : vector<4x16xf32> to vector<4x16x1xf32>
    %120 = vector.broadcast %119 : vector<4x16x1xf32> to vector<4x16x16xf32>
    %121 = arith.subf %117, %120 : vector<4x16x16xf32>
    %122 = math.exp %121 : vector<4x16x16xf32>
    "tpu.trace_start"() <{level = 10 : i32, message = "hqk,hkd->hqd"}> : () -> ()
    %cst_39 = arith.constant dense<0.000000e+00> : vector<4x16x8xf32>
    %123 = tpu.matmul %122, %108, %cst_39 {dimension_numbers = #tpu.dot_dimension_numbers<[2], [1], [1], [2], [0, 0, 0, 1, 1, 2], [0], [0]>} : vector<4x16x16xf32>, vector<4x16x8xf32>, vector<4x16x8xf32> -> vector<4x16x8xf32>
    "tpu.trace_stop"() : () -> ()
    %cst_40 = arith.constant dense<0.000000e+00> : vector<4x16xf32>
    %124 = vector.multi_reduction <add>, %122, %cst_40 [2] : vector<4x16x16xf32> to vector<4x16xf32>
    %125 = vector.shape_cast %124 : vector<4x16xf32> to vector<4x16x1xf32>
    %126 = vector.broadcast %125 : vector<4x16x1xf32> to vector<4x16x8xf32>
    %127 = arith.divf %123, %126 : vector<4x16x8xf32>
    %128 = vector.extract_strided_slice %127 {offsets = [0, 0, 0], sizes = [1, 16, 8], strides = [1, 1, 1]} : vector<4x16x8xf32> to vector<1x16x8xf32>
    %129 = vector.shape_cast %128 : vector<1x16x8xf32> to vector<16x8xf32>
    %130 = vector.extract_strided_slice %127 {offsets = [1, 0, 0], sizes = [1, 16, 8], strides = [1, 1, 1]} : vector<4x16x8xf32> to vector<1x16x8xf32>
    %131 = vector.shape_cast %130 : vector<1x16x8xf32> to vector<16x8xf32>
    %132 = vector.extract_strided_slice %127 {offsets = [2, 0, 0], sizes = [1, 16, 8], strides = [1, 1, 1]} : vector<4x16x8xf32> to vector<1x16x8xf32>
    %133 = vector.shape_cast %132 : vector<1x16x8xf32> to vector<16x8xf32>
    %134 = vector.extract_strided_slice %127 {offsets = [3, 0, 0], sizes = [1, 16, 8], strides = [1, 1, 1]} : vector<4x16x8xf32> to vector<1x16x8xf32>
    %135 = vector.shape_cast %134 : vector<1x16x8xf32> to vector<16x8xf32>
    %136 = tpu.concatenate %129, %131, %133, %135 in 1 : vector<16x8xf32>, vector<16x8xf32>, vector<16x8xf32>, vector<16x8xf32> -> vector<16x32xf32>
    %cst_41 = arith.constant dense<0.000000e+00> : vector<16x32xf32>
    %137 = tpu.matmul %136, %111, %cst_41 {dimension_numbers = #tpu.dot_dimension_numbers<[1], [0], [0], [1], [0, 0, 1, 1], [], []>} : vector<16x32xf32>, vector<32x32xf32>, vector<16x32xf32> -> vector<16x32xf32>
    %138 = vector.broadcast %113 : vector<1x32xf32> to vector<16x32xf32>
    %139 = arith.addf %137, %138 : vector<16x32xf32>
    %140 = arith.addf %67, %139 : vector<16x32xf32>
    %c0_42 = arith.constant 0 : index
    %c0_43 = arith.constant 0 : index
    %141 = vector.load %arg9[%c0_42, %c0_43] : memref<32x16xf32, #tpu.memory_space<vmem>>, vector<32x16xf32>
    %cst_44 = arith.constant dense<0.000000e+00> : vector<16x16xf32>
    %142 = tpu.matmul %140, %141, %cst_44 {dimension_numbers = #tpu.dot_dimension_numbers<[1], [0], [0], [1], [0, 0, 1, 1], [], []>} : vector<16x32xf32>, vector<32x16xf32>, vector<16x16xf32> -> vector<16x16xf32>
    %c0_45 = arith.constant 0 : index
    %c0_46 = arith.constant 0 : index
    %143 = vector.load %arg10[%c0_45, %c0_46] : memref<1x16xf32, #tpu.memory_space<vmem>>, vector<1x16xf32>
    %144 = vector.broadcast %143 : vector<1x16xf32> to vector<16x16xf32>
    %145 = arith.addf %142, %144 : vector<16x16xf32>
    %c0_47 = arith.constant 0 : index
    %c0_48 = arith.constant 0 : index
    %146 = vector.load %arg11[%c0_47, %c0_48] : memref<16x32xf32, #tpu.memory_space<vmem>>, vector<16x32xf32>
    %cst_49 = arith.constant dense<0.000000e+00> : vector<16x32xf32>
    %147 = tpu.matmul %145, %146, %cst_49 {dimension_numbers = #tpu.dot_dimension_numbers<[1], [0], [0], [1], [0, 0, 1, 1], [], []>} : vector<16x16xf32>, vector<16x32xf32>, vector<16x32xf32> -> vector<16x32xf32>
    %c0_50 = arith.constant 0 : index
    %c0_51 = arith.constant 0 : index
    %148 = vector.load %arg12[%c0_50, %c0_51] : memref<1x32xf32, #tpu.memory_space<vmem>>, vector<1x32xf32>
    %149 = vector.broadcast %148 : vector<1x32xf32> to vector<16x32xf32>
    %150 = arith.addf %147, %149 : vector<16x32xf32>
    %151 = arith.addf %140, %150 : vector<16x32xf32>
    %c0_52 = arith.constant 0 : index
    %c0_53 = arith.constant 0 : index
    %152 = vector.load %arg13[%c0_52, %c0_53] : memref<16x32xf32, #tpu.memory_space<vmem>>, vector<16x32xf32>
    tpu.vector_store %arg13[%c0_52, %c0_53], %151 {strides = array<i32>} : memref<16x32xf32, #tpu.memory_space<vmem>>, vector<16x32xf32>,
    return
  }
  func.func @transform_0(%arg0: i32) -> (i32, i32) {
    %c0_i32 = arith.constant 0 : i32
    %c0_i32_0 = arith.constant 0 : i32
    %c0_i32_1 = arith.constant 0 : i32
    return %c0_i32, %c0_i32_0 : i32, i32
  }
  func.func @transform_1(%arg0: i32) -> (i32, i32) {
    %c0_i32 = arith.constant 0 : i32
    %c0_i32_0 = arith.constant 0 : i32
    %c0_i32_1 = arith.constant 0 : i32
    return %c0_i32, %c0_i32_0 : i32, i32
  }
  func.func @transform_2(%arg0: i32) -> (i32, i32) {
    %c0_i32 = arith.constant 0 : i32
    %c0_i32_0 = arith.constant 0 : i32
    %c0_i32_1 = arith.constant 0 : i32
    return %c0_i32, %c0_i32_0 : i32, i32
  }
  func.func @transform_3(%arg0: i32) -> (i32, i32) {
    %c0_i32 = arith.constant 0 : i32
    %c0_i32_0 = arith.constant 0 : i32
    %c0_i32_1 = arith.constant 0 : i32
    return %c0_i32, %c0_i32_0 : i32, i32
  }
  func.func @transform_4(%arg0: i32) -> (i32, i32, i32) {
    %c0_i32 = arith.constant 0 : i32
    %c0_i32_0 = arith.constant 0 : i32
    %c0_i32_1 = arith.constant 0 : i32
    %c0_i32_2 = arith.constant 0 : i32
    return %c0_i32, %c0_i32_0, %c0_i32_1 : i32, i32, i32
  }
  func.func @transform_5(%arg0: i32) -> (i32, i32, i32) {
    %c0_i32 = arith.constant 0 : i32
    %c0_i32_0 = arith.constant 0 : i32
    %c0_i32_1 = arith.constant 0 : i32
    %c0_i32_2 = arith.constant 0 : i32
    return %c0_i32, %c0_i32_0, %c0_i32_1 : i32, i32, i32
  }
  func.func @transform_6(%arg0: i32) -> (i32, i32, i32) {
    %c0_i32 = arith.constant 0 : i32
    %c0_i32_0 = arith.constant 0 : i32
    %c0_i32_1 = arith.constant 0 : i32
    %c0_i32_2 = arith.constant 0 : i32
    return %c0_i32, %c0_i32_0, %c0_i32_1 : i32, i32, i32
  }
  func.func @transform_7(%arg0: i32) -> (i32, i32, i32) {
    %c0_i32 = arith.constant 0 : i32
    %c0_i32_0 = arith.constant 0 : i32
    %c0_i32_1 = arith.constant 0 : i32
    %c0_i32_2 = arith.constant 0 : i32
    return %c0_i32, %c0_i32_0, %c0_i32_1 : i32, i32, i32
  }
  func.func @transform_8(%arg0: i32) -> (i32, i32) {
    %c0_i32 = arith.constant 0 : i32
    %c0_i32_0 = arith.constant 0 : i32
    %c0_i32_1 = arith.constant 0 : i32
    return %c0_i32, %c0_i32_0 : i32, i32
  }
  func.func @transform_9(%arg0: i32) -> (i32, i32) {
    %c0_i32 = arith.constant 0 : i32
    %c0_i32_0 = arith.constant 0 : i32
    %c0_i32_1 = arith.constant 0 : i32
    return %c0_i32, %c0_i32_0 : i32, i32
  }
  func.func @transform_10(%arg0: i32) -> (i32, i32) {
    %c0_i32 = arith.constant 0 : i32
    %c0_i32_0 = arith.constant 0 : i32
    %c0_i32_1 = arith.constant 0 : i32
    return %c0_i32, %c0_i32_0 : i32, i32
  }
  func.func @transform_11(%arg0: i32) -> (i32, i32) {
    %c0_i32 = arith.constant 0 : i32
    %c0_i32_0 = arith.constant 0 : i32
    %c0_i32_1 = arith.constant 0 : i32
    return %c0_i32, %c0_i32_0 : i32, i32
  }
  func.func @transform_12(%arg0: i32) -> (i32, i32) {
    %c0_i32 = arith.constant 0 : i32
    %c0_i32_0 = arith.constant 0 : i32
    %c0_i32_1 = arith.constant 0 : i32
    return %c0_i32, %c0_i32_0 : i32, i32
  }
}

</mosaic_0001>

<llo_original>
// kernel: transformer_decoder_layer.1
$region0: #{transformer_decoder_layer.1}
  #allocation0 [shape = 'u32[]', space=smem, size = 0x4, offset = 0x4, fixed_abs, tag = 'smem constant byte address 0x4 - core index']
  #allocation1 [shape = 'u32[144,128]{1,0:T(1,128)}', space=vmem, size = 0x12000, scoped, tag = 'internal scratch']
  %s0 = inlined_call_operand.vmem [shape: f32[16,32], index: 0, kind: input, shape index: {}]
  %s1 = inlined_call_operand.vmem [shape: f32[16,32], index: 1, kind: input, shape index: {}]
  %s2 = inlined_call_operand.vmem [shape: f32[16,16], index: 2, kind: input, shape index: {}, may-alias: {2,3}]
  %s3 = inlined_call_operand.vmem [shape: f32[16,16], index: 3, kind: input, shape index: {}, may-alias: {2,3}]
  %s4 = inlined_call_operand.hbm [shape: f32[2,32,96], index: 4, kind: input, shape index: {}]
  %s5 = inlined_call_operand.vmem [shape: f32[2,1,96], index: 5, kind: input, shape index: {}]
  %s6 = inlined_call_operand.hbm [shape: f32[2,32,32], index: 6, kind: input, shape index: {}]
  %s7 = inlined_call_operand.hbm [shape: f32[2,1,32], index: 7, kind: input, shape index: {}]
  %s8 = inlined_call_operand.vmem [shape: f32[32,16], index: 8, kind: input, shape index: {}]
  %s9 = inlined_call_operand.hbm [shape: f32[1,16], index: 9, kind: input, shape index: {}]
  %s10 = inlined_call_operand.vmem [shape: f32[16,32], index: 10, kind: input, shape index: {}]
  %s11 = inlined_call_operand.vmem [shape: f32[1,32], index: 11, kind: input, shape index: {}]
  %s12 = inlined_call_operand.hbm [shape: f32[16,32], index: 12, kind: output, shape index: {}]
  %s13 = sld [smem:[#allocation0]]
  $region74: #{transformer_decoder_layer.1} parent=0
    _
  %s15 = ssub.s32 1, %s13
  %s16 = scalar_select 0, %s15, %s13
  $region1: #{transformer_decoder_layer.1} parent=0
    #allocation2 [shape = 'u8[32768]{0}', space=vmem, size = 0x8000, scoped, tag = 'input window, operand 4, single buffered']
    #allocation3 [shape = 's32[1]{0}', space=sflag, size = 0x4, scoped, tag = 'scoped memory for transformer_decoder_layer.1']
    #allocation4 [shape = 's32[1]{0}', space=sflag, size = 0x4, scoped, tag = 'scoped memory for transformer_decoder_layer.1']
    #allocation5 [shape = 'u8[32768]{0}', space=vmem, size = 0x8000, scoped, tag = 'input window, operand 6, single buffered']
    #allocation6 [shape = 's32[1]{0}', space=sflag, size = 0x4, scoped, tag = 'scoped memory for transformer_decoder_layer.1']
    #allocation7 [shape = 'u8[1024]{0}', space=vmem, size = 0x400, scoped, tag = 'input window, operand 7, single buffered']
    #allocation8 [shape = 'u8[512]{0}', space=vmem, size = 0x400, scoped, tag = 'input window, operand 9, single buffered']
    #allocation9 [shape = 's32[1]{0}', space=sflag, size = 0x4, scoped, tag = 'scoped memory for transformer_decoder_layer.1']
    #allocation10 [shape = 'u8[8192]{0}', space=vmem, size = 0x2000, scoped, tag = 'output window, operand 0, single buffered']
    %17 = vsyncpa [#allocation3], 0
    %18 = vsyncpa [#allocation6], 0
    %19 = vsyncpa [#allocation9], 0
    %20 = vsyncpa [#allocation4], 0
    // Predicated region
    $region2: #{transformer_decoder_layer.1} parent=1 // pred_check
      _
    $region3: #{transformer_decoder_layer.1} parent=1 // pred_check_branch
      %22 = sbr.rel (0) target = $region5
    $region4: #{transformer_decoder_layer.1} parent=1 // pred_region
      _
    $region5: #{transformer_decoder_layer.1} parent=1 // pred_fallthru
      _
    // Predicated region
    $region6: #{transformer_decoder_layer.1} parent=1 // pred_check
      _
    $region7: #{transformer_decoder_layer.1} parent=1 // pred_check_branch
      %24 = sbr.rel (0) target = $region9
    $region8: #{transformer_decoder_layer.1} parent=1 // pred_region
      _
    $region9: #{transformer_decoder_layer.1} parent=1 // pred_fallthru
      _
    // Predicated region
    $region10: #{transformer_decoder_layer.1} parent=1 // pred_check
      _
    $region11: #{transformer_decoder_layer.1} parent=1 // pred_check_branch
      %26 = sbr.rel (0) target = $region13
    $region12: #{transformer_decoder_layer.1} parent=1 // pred_region
      _
    $region13: #{transformer_decoder_layer.1} parent=1 // pred_fallthru
      _
    // Predicated region
    $region14: #{transformer_decoder_layer.1} parent=1 // pred_check
      _
    $region15: #{transformer_decoder_layer.1} parent=1 // pred_check_branch
      %28 = sbr.rel (0) target = $region17
    $region16: #{transformer_decoder_layer.1} parent=1 // pred_region
      _
    $region17: #{transformer_decoder_layer.1} parent=1 // pred_fallthru
      _
    // Predicated region
    $region18: #{transformer_decoder_layer.1} parent=1 // pred_check
      _
    $region19: #{transformer_decoder_layer.1} parent=1 // pred_check_branch
      %30 = sbr.rel (0) target = $region21
    $region20: #{transformer_decoder_layer.1} parent=1 // pred_region
      %s32 = ssub.s32 1024, 1024
      %33 = vsyncadd [#allocation3], %s32
      %s34 = sshll.u32 [#allocation2], 4
      %s35 = int_to_ptr.vmem [resolvable:$true] %s34
      %40 = dma.hbm_to_vmem [thread:$0]  %s4, 1024, %s35, [#allocation3], 128, 128, 8
    $region21: #{transformer_decoder_layer.1} parent=1 // pred_fallthru
      _
    // Predicated region
    $region22: #{transformer_decoder_layer.1} parent=1 // pred_check
      _
    $region23: #{transformer_decoder_layer.1} parent=1 // pred_check_branch
      %42 = sbr.rel (0) target = $region25
    $region24: #{transformer_decoder_layer.1} parent=1 // pred_region
      _
    $region25: #{transformer_decoder_layer.1} parent=1 // pred_fallthru
      _
    // Predicated region
    $region26: #{transformer_decoder_layer.1} parent=1 // pred_check
      _
    $region27: #{transformer_decoder_layer.1} parent=1 // pred_check_branch
      %44 = sbr.rel (0) target = $region29
    $region28: #{transformer_decoder_layer.1} parent=1 // pred_region
      %s46 = ssub.s32 1024, 1024
      %47 = vsyncadd [#allocation6], %s46
      %s48 = sshll.u32 [#allocation5], 4
      %s49 = int_to_ptr.vmem [resolvable:$true] %s48
      %54 = dma.hbm_to_vmem [thread:$0]  %s6, 1024, %s49, [#allocation6], 128, 128, 8
    $region29: #{transformer_decoder_layer.1} parent=1 // pred_fallthru
      _
    // Predicated region
    $region30: #{transformer_decoder_layer.1} parent=1 // pred_check
      _
    $region31: #{transformer_decoder_layer.1} parent=1 // pred_check_branch
      %56 = sbr.rel (0) target = $region33
    $region32: #{transformer_decoder_layer.1} parent=1 // pred_region
      %s58 = ssub.s32 32, 32
      %59 = vsyncadd [#allocation6], %s58
      %s60 = sshll.u32 [#allocation7], 4
      %s61 = int_to_ptr.vmem [resolvable:$true] %s60
      %66 = dma.hbm_to_vmem [thread:$0]  %s7, 32, %s61, [#allocation6], 16, 16, 1
    $region33: #{transformer_decoder_layer.1} parent=1 // pred_fallthru
      _
    // Predicated region
    $region34: #{transformer_decoder_layer.1} parent=1 // pred_check
      _
    $region35: #{transformer_decoder_layer.1} parent=1 // pred_check_branch
      %68 = sbr.rel (0) target = $region37
    $region36: #{transformer_decoder_layer.1} parent=1 // pred_region
      _
    $region37: #{transformer_decoder_layer.1} parent=1 // pred_fallthru
      _
    // Predicated region
    $region38: #{transformer_decoder_layer.1} parent=1 // pred_check
      _
    $region39: #{transformer_decoder_layer.1} parent=1 // pred_check_branch
      %70 = sbr.rel (0) target = $region41
    $region40: #{transformer_decoder_layer.1} parent=1 // pred_region
      %s72 = ssub.s32 16, 16
      %73 = vsyncadd [#allocation9], %s72
      %s75 = sshll.u32 [#allocation8], 4
      %s76 = int_to_ptr.vmem [resolvable:$true] %s75
      %78 = dma.hbm_to_vmem [thread:$0]  %s9, 16, %s76, [#allocation9]
    $region41: #{transformer_decoder_layer.1} parent=1 // pred_fallthru
      _
    // Predicated region
    $region42: #{transformer_decoder_layer.1} parent=1 // pred_check
      _
    $region43: #{transformer_decoder_layer.1} parent=1 // pred_check_branch
      %80 = sbr.rel (0) target = $region45
    $region44: #{transformer_decoder_layer.1} parent=1 // pred_region
      _
    $region45: #{transformer_decoder_layer.1} parent=1 // pred_fallthru
      _
    // Predicated region
    $region46: #{transformer_decoder_layer.1} parent=1 // pred_check
      _
    $region47: #{transformer_decoder_layer.1} parent=1 // pred_check_branch
      %82 = sbr.rel (0) target = $region49
    $region48: #{transformer_decoder_layer.1} parent=1 // pred_region
      _
    $region49: #{transformer_decoder_layer.1} parent=1 // pred_fallthru
      _
    // Predicated region
    $region50: #{transformer_decoder_layer.1} parent=1 // pred_check
      _
    $region51: #{transformer_decoder_layer.1} parent=1 // pred_check_branch
      %84 = sbr.rel (0) target = $region53
    $region52: #{transformer_decoder_layer.1} parent=1 // pred_region
      %85 = dma.done [#allocation3], 1024
    $region53: #{transformer_decoder_layer.1} parent=1 // pred_fallthru
      _
    // Predicated region
    $region54: #{transformer_decoder_layer.1} parent=1 // pred_check
      _
    $region55: #{transformer_decoder_layer.1} parent=1 // pred_check_branch
      %87 = sbr.rel (0) target = $region57
    $region56: #{transformer_decoder_layer.1} parent=1 // pred_region
      %88 = dma.done [#allocation6], 1024
    $region57: #{transformer_decoder_layer.1} parent=1 // pred_fallthru
      _
    // Predicated region
    $region58: #{transformer_decoder_layer.1} parent=1 // pred_check
      _
    $region59: #{transformer_decoder_layer.1} parent=1 // pred_check_branch
      %90 = sbr.rel (0) target = $region61
    $region60: #{transformer_decoder_layer.1} parent=1 // pred_region
      %91 = dma.done [#allocation6], 32
    $region61: #{transformer_decoder_layer.1} parent=1 // pred_fallthru
      _
    // Predicated region
    $region62: #{transformer_decoder_layer.1} parent=1 // pred_check
      _
    $region63: #{transformer_decoder_layer.1} parent=1 // pred_check_branch
      %93 = sbr.rel (0) target = $region65
    $region64: #{transformer_decoder_layer.1} parent=1 // pred_region
      %94 = dma.done [#allocation9], 16
    $region65: #{transformer_decoder_layer.1} parent=1 // pred_fallthru
      _
    %v95 = vld [vmem:[%s0] sm:$0xff]
    %v96 = vld [vmem:[%s0 + $0x8] sm:$0xff]
    %v97 = vld [vmem:[%s1] sm:$0xff]
    %v98 = vld [vmem:[%s1 + $0x8] sm:$0xff]
    %v99 = vld [vmem:[#allocation2] sm:$0xff]
    %v100 = vld [vmem:[#allocation2 + $0x8] sm:$0xff]
    %v101 = vld [vmem:[#allocation2 + $0x10] sm:$0xff]
    %v102 = vld [vmem:[#allocation2 + $0x18] sm:$0xff]
    %v103 = vld [vmem:[%s5] sm:$0x1]
    %v105 = vlaneseq
    %v106 = vshrl.u32 %v105, 7
    %v107 = vsub.s32 0, %v106
    %v108 = vrot.slane %v103, %v107
    %vm110 = vcmask 261120
    %v112 = vsel %vm110, %v95, 0
    %v115 = vsel %vm110, %v96, 0
    %117 = vmatprep.subr.mxu0 0.0
    %118 = vmatpush1.msra.mxu0 %v99
    %119 = vmatprep.subr.mxu0 0.0
    %120 = vmatpush1.msra.mxu0 %v100
    %121 = vmatprep.subr.mxu0 0.0
    %122 = vmatpush1.msra.mxu0 %v101
    %123 = vmatprep.subr.mxu0 0.0
    %124 = vmatpush1.msra.mxu0 %v102
    %125 = vmatprep.subr.mxu0 0.0
    %126 = vmatpush1.msra.mxu0 0.0
    %127 = vmatprep.subr.mxu0 0.0
    %128 = vmatpush1.msra.mxu0 0.0
    %129 = vmatprep.subr.mxu0 0.0
    %130 = vmatpush1.msra.mxu0 0.0
    %131 = vmatprep.subr.mxu0 0.0
    %132 = vmatpush1.msra.mxu0 0.0
    %133 = vmatprep.subr.mxu0 0.0
    %134 = vmatpush1.msra.mxu0 0.0
    %135 = vmatprep.subr.mxu0 0.0
    %136 = vmatpush1.msra.mxu0 0.0
    %137 = vmatprep.subr.mxu0 0.0
    %138 = vmatpush1.msra.mxu0 0.0
    %139 = vmatprep.subr.mxu0 0.0
    %140 = vmatpush1.msra.mxu0 0.0
    %141 = vmatprep.subr.mxu0 0.0
    %142 = vmatpush1.msra.mxu0 0.0
    %143 = vmatprep.subr.mxu0 0.0
    %144 = vmatpush1.msra.mxu0 0.0
    %145 = vmatprep.subr.mxu0 0.0
    %146 = vmatpush1.msra.mxu0 0.0
    %147 = vmatprep.subr.mxu0 0.0
    %148 = vmatpush1.msra.mxu0 0.0
    %149 = vmatprep.subr.mxu0 0.0
    %150 = vmatpush1.msra.mxu0 0.0
    %151 = vmatprep.subr.mxu0 0.0
    %152 = vmatpush1.msra.mxu0 0.0
    %153 = vmatprep.subr.mxu0 0.0
    %154 = vmatpush1.msra.mxu0 0.0
    %155 = vmatprep.subr.mxu0 0.0
    %156 = vmatpush1.msra.mxu0 0.0
    %157 = vmatprep.subr.mxu0 0.0
    %158 = vmatpush1.msra.mxu0 0.0
    %159 = vmatprep.subr.mxu0 0.0
    %160 = vmatpush1.msra.mxu0 0.0
    %161 = vmatprep.subr.mxu0 0.0
    %162 = vmatpush1.msra.mxu0 0.0
    %163 = vmatprep.subr.mxu0 0.0
    %164 = vmatpush1.msra.mxu0 0.0
    %165 = vmatprep.subr.mxu0 0.0
    %166 = vmatpush1.msra.mxu0 0.0
    %167 = vmatprep.subr.mxu0 0.0
    %168 = vmatpush1.msra.mxu0 0.0
    %169 = vmatprep.subr.mxu0 0.0
    %170 = vmatpush1.msra.mxu0 0.0
    %171 = vmatprep.subr.mxu0 0.0
    %172 = vmatpush1.msra.mxu0 0.0
    %173 = vmatprep.subr.mxu0 0.0
    %174 = vmatpush1.msra.mxu0 0.0
    %175 = vmatprep.subr.mxu0 0.0
    %176 = vmatpush1.msra.mxu0 0.0
    %177 = vmatprep.subr.mxu0 0.0
    %178 = vmatpush1.msra.mxu0 0.0
    %179 = vmatprep.subr.mxu0 0.0
    %180 = vmatpush1.msra.mxu0 0.0
    %181 = vmatprep.mubr.f32.mxu0 0.0
    %182 = vmatmul.mubr.f32.gmra.mrb[0].mxu0 %v112
    %v183 = vpop.f32.mrb[0].mxu0
    %v184 = vadd.f32 %v108, %v183
    %v185 = vpop.f32.mrb[0].mxu0
    %186 = vmatprep.mubr.f32.mxu0 0.0
    %187 = vmatmul.mubr.f32.gmra.mrb[0].mxu0 %v115
    %v188 = vpop.f32.mrb[0].mxu0
    %v189 = vadd.f32 %v108, %v188
    %v190 = vpop.f32.mrb[0].mxu0
    %191 = vdwg.mxu0
    %194 = vrot.lane.b32.xlu0 %v184, 120
    %v195 = vpop.permute.xlu0 %194
    %196 = vrot.lane.b32.xlu0 %v189, 120
    %v197 = vpop.permute.xlu0 %196
    %198 = vrot.lane.b32.xlu0 %v184, 112
    %v199 = vpop.permute.xlu0 %198
    %200 = vrot.lane.b32.xlu0 %v189, 112
    %v201 = vpop.permute.xlu0 %200
    %202 = vrot.lane.b32.xlu0 %v184, 104
    %v203 = vpop.permute.xlu0 %202
    %204 = vrot.lane.b32.xlu0 %v189, 104
    %v205 = vpop.permute.xlu0 %204
    %v206 = vld [vmem:[%s2] sm:$0xff]
    %v207 = vld [vmem:[%s2 + $0x8] sm:$0xff]
    %v208 = vld [vmem:[#allocation5] sm:$0xff]
    %v209 = vld [vmem:[#allocation5 + $0x8] sm:$0xff]
    %v210 = vld [vmem:[#allocation5 + $0x10] sm:$0xff]
    %v211 = vld [vmem:[#allocation5 + $0x18] sm:$0xff]
    %v212 = vld [vmem:[#allocation7] sm:$0x1]
    %213 = vrot.lane.b32.xlu0 %v184, 96
    %v214 = vpop.permute.xlu0 %213
    %215 = vrot.lane.b32.xlu0 %v189, 96
    %v216 = vpop.permute.xlu0 %215
    %vm217 = vcmask 64512
    %v218 = vsel %vm217, %v184, 0
    %v220 = vsel %vm217, %v189, 0
    %v222 = vsel %vm217, %v214, 0
    %v224 = vsel %vm217, %v216, 0
    %226 = vmatprep.subr.mxu0 0.0
    %227 = vmatpush1.xpose.msra.mxu0 %v222
    %228 = vmatprep.subr.mxu0 0.0
    %229 = vmatpush1.xpose.msra.mxu0 %v224
    %230 = vmatprep.subr.mxu0 0.0
    %231 = vmatpush1.xpose.msra.mxu0 0.0
    %232 = vmatprep.subr.mxu0 0.0
    %233 = vmatpush1.xpose.msra.mxu0 0.0
    %234 = vmatprep.subr.mxu0 0.0
    %235 = vmatpush1.xpose.msra.mxu0 0.0
    %236 = vmatprep.subr.mxu0 0.0
    %237 = vmatpush1.xpose.msra.mxu0 0.0
    %238 = vmatprep.subr.mxu0 0.0
    %239 = vmatpush1.xpose.msra.mxu0 0.0
    %240 = vmatprep.subr.mxu0 0.0
    %241 = vmatpush1.xpose.msra.mxu0 0.0
    %242 = vmatprep.subr.mxu0 0.0
    %243 = vmatpush1.xpose.msra.mxu0 0.0
    %244 = vmatprep.subr.mxu0 0.0
    %245 = vmatpush1.xpose.msra.mxu0 0.0
    %246 = vmatprep.subr.mxu0 0.0
    %247 = vmatpush1.xpose.msra.mxu0 0.0
    %248 = vmatprep.subr.mxu0 0.0
    %249 = vmatpush1.xpose.msra.mxu0 0.0
    %250 = vmatprep.subr.mxu0 0.0
    %251 = vmatpush1.xpose.msra.mxu0 0.0
    %252 = vmatprep.subr.mxu0 0.0
    %253 = vmatpush1.xpose.msra.mxu0 0.0
    %254 = vmatprep.subr.mxu0 0.0
    %255 = vmatpush1.xpose.msra.mxu0 0.0
    %256 = vmatprep.subr.mxu0 0.0
    %257 = vmatpush1.xpose.msra.mxu0 0.0
    %258 = vmatprep.subr.mxu0 0.0
    %259 = vmatpush1.xpose.msra.mxu0 0.0
    %260 = vmatprep.subr.mxu0 0.0
    %261 = vmatpush1.xpose.msra.mxu0 0.0
    %262 = vmatprep.subr.mxu0 0.0
    %263 = vmatpush1.xpose.msra.mxu0 0.0
    %264 = vmatprep.subr.mxu0 0.0
    %265 = vmatpush1.xpose.msra.mxu0 0.0
    %266 = vmatprep.subr.mxu0 0.0
    %267 = vmatpush1.xpose.msra.mxu0 0.0
    %268 = vmatprep.subr.mxu0 0.0
    %269 = vmatpush1.xpose.msra.mxu0 0.0
    %270 = vmatprep.subr.mxu0 0.0
    %271 = vmatpush1.xpose.msra.mxu0 0.0
    %272 = vmatprep.subr.mxu0 0.0
    %273 = vmatpush1.xpose.msra.mxu0 0.0
    %274 = vmatprep.subr.mxu0 0.0
    %275 = vmatpush1.xpose.msra.mxu0 0.0
    %276 = vmatprep.subr.mxu0 0.0
    %277 = vmatpush1.xpose.msra.mxu0 0.0
    %278 = vmatprep.subr.mxu0 0.0
    %279 = vmatpush1.xpose.msra.mxu0 0.0
    %280 = vmatprep.subr.mxu0 0.0
    %281 = vmatpush1.xpose.msra.mxu0 0.0
    %282 = vmatprep.subr.mxu0 0.0
    %283 = vmatpush1.xpose.msra.mxu0 0.0
    %284 = vmatprep.subr.mxu0 0.0
    %285 = vmatpush1.xpose.msra.mxu0 0.0
    %286 = vmatprep.subr.mxu0 0.0
    %287 = vmatpush1.xpose.msra.mxu0 0.0
    %288 = vmatprep.subr.mxu0 0.0
    %289 = vmatpush1.xpose.msra.mxu0 0.0
    %290 = vmatprep.mubr.f32.mxu0 0.0
    %291 = vmatmul.mubr.f32.gmra.mrb[0].mxu0 %v218
    %v292 = vpop.f32.mrb[0].mxu0
    %v293 = vadd.f32 %v206, %v292
    %v294 = vpop.f32.mrb[0].mxu0
    %295 = vmatprep.mubr.f32.mxu0 0.0
    %296 = vmatmul.mubr.f32.gmra.mrb[0].mxu0 %v220
    %v297 = vpop.f32.mrb[0].mxu0
    %v298 = vadd.f32 %v207, %v297
    %v299 = vpop.f32.mrb[0].mxu0
    %300 = vdwg.mxu0
    %301 = vrot.lane.b32.xlu0 %v195, 96
    %v302 = vpop.permute.xlu0 %301
    %303 = vrot.lane.b32.xlu0 %v197, 96
    %v304 = vpop.permute.xlu0 %303
    %v305 = vsel %vm217, %v195, 0
    %v307 = vsel %vm217, %v197, 0
    %v309 = vsel %vm217, %v302, 0
    %v311 = vsel %vm217, %v304, 0
    %313 = vmatprep.subr.mxu0 0.0
    %314 = vmatpush1.xpose.msra.mxu0 %v309
    %315 = vmatprep.subr.mxu0 0.0
    %316 = vmatpush1.xpose.msra.mxu0 %v311
    %317 = vmatprep.subr.mxu0 0.0
    %318 = vmatpush1.xpose.msra.mxu0 0.0
    %319 = vmatprep.subr.mxu0 0.0
    %320 = vmatpush1.xpose.msra.mxu0 0.0
    %321 = vmatprep.subr.mxu0 0.0
    %322 = vmatpush1.xpose.msra.mxu0 0.0
    %323 = vmatprep.subr.mxu0 0.0
    %324 = vmatpush1.xpose.msra.mxu0 0.0
    %325 = vmatprep.subr.mxu0 0.0
    %326 = vmatpush1.xpose.msra.mxu0 0.0
    %327 = vmatprep.subr.mxu0 0.0
    %328 = vmatpush1.xpose.msra.mxu0 0.0
    %329 = vmatprep.subr.mxu0 0.0
    %330 = vmatpush1.xpose.msra.mxu0 0.0
    %331 = vmatprep.subr.mxu0 0.0
    %332 = vmatpush1.xpose.msra.mxu0 0.0
    %333 = vmatprep.subr.mxu0 0.0
    %334 = vmatpush1.xpose.msra.mxu0 0.0
    %335 = vmatprep.subr.mxu0 0.0
    %336 = vmatpush1.xpose.msra.mxu0 0.0
    %337 = vmatprep.subr.mxu0 0.0
    %338 = vmatpush1.xpose.msra.mxu0 0.0
    %339 = vmatprep.subr.mxu0 0.0
    %340 = vmatpush1.xpose.msra.mxu0 0.0
    %341 = vmatprep.subr.mxu0 0.0
    %342 = vmatpush1.xpose.msra.mxu0 0.0
    %343 = vmatprep.subr.mxu0 0.0
    %344 = vmatpush1.xpose.msra.mxu0 0.0
    %345 = vmatprep.subr.mxu0 0.0
    %346 = vmatpush1.xpose.msra.mxu0 0.0
    %347 = vmatprep.subr.mxu0 0.0
    %348 = vmatpush1.xpose.msra.mxu0 0.0
    %349 = vmatprep.subr.mxu0 0.0
    %350 = vmatpush1.xpose.msra.mxu0 0.0
    %351 = vmatprep.subr.mxu0 0.0
    %352 = vmatpush1.xpose.msra.mxu0 0.0
    %353 = vmatprep.subr.mxu0 0.0
    %354 = vmatpush1.xpose.msra.mxu0 0.0
    %355 = vmatprep.subr.mxu0 0.0
    %356 = vmatpush1.xpose.msra.mxu0 0.0
    %357 = vmatprep.subr.mxu0 0.0
    %358 = vmatpush1.xpose.msra.mxu0 0.0
    %359 = vmatprep.subr.mxu0 0.0
    %360 = vmatpush1.xpose.msra.mxu0 0.0
    %361 = vmatprep.subr.mxu0 0.0
    %362 = vmatpush1.xpose.msra.mxu0 0.0
    %363 = vmatprep.subr.mxu0 0.0
    %364 = vmatpush1.xpose.msra.mxu0 0.0
    %365 = vmatprep.subr.mxu0 0.0
    %366 = vmatpush1.xpose.msra.mxu0 0.0
    %367 = vmatprep.subr.mxu0 0.0
    %368 = vmatpush1.xpose.msra.mxu0 0.0
    %369 = vmatprep.subr.mxu0 0.0
    %370 = vmatpush1.xpose.msra.mxu0 0.0
    %371 = vmatprep.subr.mxu0 0.0
    %372 = vmatpush1.xpose.msra.mxu0 0.0
    %373 = vmatprep.subr.mxu0 0.0
    %374 = vmatpush1.xpose.msra.mxu0 0.0
    %375 = vmatprep.subr.mxu0 0.0
    %376 = vmatpush1.xpose.msra.mxu0 0.0
    %377 = vmatprep.mubr.f32.mxu0 0.0
    %378 = vmatmul.mubr.f32.gmra.mrb[0].mxu0 %v305
    %v379 = vpop.f32.mrb[0].mxu0
    %v380 = vadd.f32 %v206, %v379
    %v381 = vpop.f32.mrb[0].mxu0
    %382 = vmatprep.mubr.f32.mxu0 0.0
    %383 = vmatmul.mubr.f32.gmra.mrb[0].mxu0 %v307
    %v384 = vpop.f32.mrb[0].mxu0
    %v385 = vadd.f32 %v207, %v384
    %v386 = vpop.f32.mrb[0].mxu0
    %387 = vdwg.mxu0
    %388 = vrot.lane.b32.xlu0 %v199, 96
    %v389 = vpop.permute.xlu0 %388
    %390 = vrot.lane.b32.xlu0 %v201, 96
    %v391 = vpop.permute.xlu0 %390
    %v392 = vsel %vm217, %v199, 0
    %v394 = vsel %vm217, %v201, 0
    %v396 = vsel %vm217, %v389, 0
    %v398 = vsel %vm217, %v391, 0
    %400 = vmatprep.subr.mxu0 0.0
    %401 = vmatpush1.xpose.msra.mxu0 %v396
    %402 = vmatprep.subr.mxu0 0.0
    %403 = vmatpush1.xpose.msra.mxu0 %v398
    %404 = vmatprep.subr.mxu0 0.0
    %405 = vmatpush1.xpose.msra.mxu0 0.0
    %406 = vmatprep.subr.mxu0 0.0
    %407 = vmatpush1.xpose.msra.mxu0 0.0
    %408 = vmatprep.subr.mxu0 0.0
    %409 = vmatpush1.xpose.msra.mxu0 0.0
    %410 = vmatprep.subr.mxu0 0.0
    %411 = vmatpush1.xpose.msra.mxu0 0.0
    %412 = vmatprep.subr.mxu0 0.0
    %413 = vmatpush1.xpose.msra.mxu0 0.0
    %414 = vmatprep.subr.mxu0 0.0
    %415 = vmatpush1.xpose.msra.mxu0 0.0
    %416 = vmatprep.subr.mxu0 0.0
    %417 = vmatpush1.xpose.msra.mxu0 0.0
    %418 = vmatprep.subr.mxu0 0.0
    %419 = vmatpush1.xpose.msra.mxu0 0.0
    %420 = vmatprep.subr.mxu0 0.0
    %421 = vmatpush1.xpose.msra.mxu0 0.0
    %422 = vmatprep.subr.mxu0 0.0
    %423 = vmatpush1.xpose.msra.mxu0 0.0
    %424 = vmatprep.subr.mxu0 0.0
    %425 = vmatpush1.xpose.msra.mxu0 0.0
    %426 = vmatprep.subr.mxu0 0.0
    %427 = vmatpush1.xpose.msra.mxu0 0.0
    %428 = vmatprep.subr.mxu0 0.0
    %429 = vmatpush1.xpose.msra.mxu0 0.0
    %430 = vmatprep.subr.mxu0 0.0
    %431 = vmatpush1.xpose.msra.mxu0 0.0
    %432 = vmatprep.subr.mxu0 0.0
    %433 = vmatpush1.xpose.msra.mxu0 0.0
    %434 = vmatprep.subr.mxu0 0.0
    %435 = vmatpush1.xpose.msra.mxu0 0.0
    %436 = vmatprep.subr.mxu0 0.0
    %437 = vmatpush1.xpose.msra.mxu0 0.0
    %438 = vmatprep.subr.mxu0 0.0
    %439 = vmatpush1.xpose.msra.mxu0 0.0
    %440 = vmatprep.subr.mxu0 0.0
    %441 = vmatpush1.xpose.msra.mxu0 0.0
    %442 = vmatprep.subr.mxu0 0.0
    %443 = vmatpush1.xpose.msra.mxu0 0.0
    %444 = vmatprep.subr.mxu0 0.0
    %445 = vmatpush1.xpose.msra.mxu0 0.0
    %446 = vmatprep.subr.mxu0 0.0
    %447 = vmatpush1.xpose.msra.mxu0 0.0
    %448 = vmatprep.subr.mxu0 0.0
    %449 = vmatpush1.xpose.msra.mxu0 0.0
    %450 = vmatprep.subr.mxu0 0.0
    %451 = vmatpush1.xpose.msra.mxu0 0.0
    %452 = vmatprep.subr.mxu0 0.0
    %453 = vmatpush1.xpose.msra.mxu0 0.0
    %454 = vmatprep.subr.mxu0 0.0
    %455 = vmatpush1.xpose.msra.mxu0 0.0
    %456 = vmatprep.subr.mxu0 0.0
    %457 = vmatpush1.xpose.msra.mxu0 0.0
    %458 = vmatprep.subr.mxu0 0.0
    %459 = vmatpush1.xpose.msra.mxu0 0.0
    %460 = vmatprep.subr.mxu0 0.0
    %461 = vmatpush1.xpose.msra.mxu0 0.0
    %462 = vmatprep.subr.mxu0 0.0
    %463 = vmatpush1.xpose.msra.mxu0 0.0
    %464 = vmatprep.mubr.f32.mxu0 0.0
    %465 = vmatmul.mubr.f32.gmra.mrb[0].mxu0 %v392
    %v466 = vpop.f32.mrb[0].mxu0
    %v467 = vadd.f32 %v206, %v466
    %v468 = vpop.f32.mrb[0].mxu0
    %469 = vmatprep.mubr.f32.mxu0 0.0
    %470 = vmatmul.mubr.f32.gmra.mrb[0].mxu0 %v394
    %v471 = vpop.f32.mrb[0].mxu0
    %v472 = vadd.f32 %v207, %v471
    %v473 = vpop.f32.mrb[0].mxu0
    %474 = vdwg.mxu0
    %475 = vrot.lane.b32.xlu0 %v203, 96
    %v476 = vpop.permute.xlu0 %475
    %477 = vrot.lane.b32.xlu0 %v205, 96
    %v478 = vpop.permute.xlu0 %477
    %v479 = vsel %vm217, %v203, 0
    %v481 = vsel %vm217, %v205, 0
    %v483 = vsel %vm217, %v476, 0
    %v485 = vsel %vm217, %v478, 0
    %487 = vmatprep.subr.mxu0 0.0
    %488 = vmatpush1.xpose.msra.mxu0 %v483
    %489 = vmatprep.subr.mxu0 0.0
    %490 = vmatpush1.xpose.msra.mxu0 %v485
    %491 = vmatprep.subr.mxu0 0.0
    %492 = vmatpush1.xpose.msra.mxu0 0.0
    %493 = vmatprep.subr.mxu0 0.0
    %494 = vmatpush1.xpose.msra.mxu0 0.0
    %495 = vmatprep.subr.mxu0 0.0
    %496 = vmatpush1.xpose.msra.mxu0 0.0
    %497 = vmatprep.subr.mxu0 0.0
    %498 = vmatpush1.xpose.msra.mxu0 0.0
    %499 = vmatprep.subr.mxu0 0.0
    %500 = vmatpush1.xpose.msra.mxu0 0.0
    %501 = vmatprep.subr.mxu0 0.0
    %502 = vmatpush1.xpose.msra.mxu0 0.0
    %503 = vmatprep.subr.mxu0 0.0
    %504 = vmatpush1.xpose.msra.mxu0 0.0
    %505 = vmatprep.subr.mxu0 0.0
    %506 = vmatpush1.xpose.msra.mxu0 0.0
    %507 = vmatprep.subr.mxu0 0.0
    %508 = vmatpush1.xpose.msra.mxu0 0.0
    %509 = vmatprep.subr.mxu0 0.0
    %510 = vmatpush1.xpose.msra.mxu0 0.0
    %511 = vmatprep.subr.mxu0 0.0
    %512 = vmatpush1.xpose.msra.mxu0 0.0
    %513 = vmatprep.subr.mxu0 0.0
    %514 = vmatpush1.xpose.msra.mxu0 0.0
    %515 = vmatprep.subr.mxu0 0.0
    %516 = vmatpush1.xpose.msra.mxu0 0.0
    %517 = vmatprep.subr.mxu0 0.0
    %518 = vmatpush1.xpose.msra.mxu0 0.0
    %519 = vmatprep.subr.mxu0 0.0
    %520 = vmatpush1.xpose.msra.mxu0 0.0
    %521 = vmatprep.subr.mxu0 0.0
    %522 = vmatpush1.xpose.msra.mxu0 0.0
    %523 = vmatprep.subr.mxu0 0.0
    %524 = vmatpush1.xpose.msra.mxu0 0.0
    %525 = vmatprep.subr.mxu0 0.0
    %526 = vmatpush1.xpose.msra.mxu0 0.0
    %527 = vmatprep.subr.mxu0 0.0
    %528 = vmatpush1.xpose.msra.mxu0 0.0
    %529 = vmatprep.subr.mxu0 0.0
    %530 = vmatpush1.xpose.msra.mxu0 0.0
    %531 = vmatprep.subr.mxu0 0.0
    %532 = vmatpush1.xpose.msra.mxu0 0.0
    %533 = vmatprep.subr.mxu0 0.0
    %534 = vmatpush1.xpose.msra.mxu0 0.0
    %535 = vmatprep.subr.mxu0 0.0
    %536 = vmatpush1.xpose.msra.mxu0 0.0
    %537 = vmatprep.subr.mxu0 0.0
    %538 = vmatpush1.xpose.msra.mxu0 0.0
    %539 = vmatprep.subr.mxu0 0.0
    %540 = vmatpush1.xpose.msra.mxu0 0.0
    %541 = vmatprep.subr.mxu0 0.0
    %542 = vmatpush1.xpose.msra.mxu0 0.0
    %543 = vmatprep.subr.mxu0 0.0
    %544 = vmatpush1.xpose.msra.mxu0 0.0
    %545 = vmatprep.subr.mxu0 0.0
    %546 = vmatpush1.xpose.msra.mxu0 0.0
    %547 = vmatprep.subr.mxu0 0.0
    %548 = vmatpush1.xpose.msra.mxu0 0.0
    %549 = vmatprep.subr.mxu0 0.0
    %550 = vmatpush1.xpose.msra.mxu0 0.0
    %551 = vmatprep.mubr.f32.mxu0 0.0
    %552 = vmatmul.mubr.f32.gmra.mrb[0].mxu0 %v479
    %v553 = vpop.f32.mrb[0].mxu0
    %v554 = vadd.f32 %v206, %v553
    %v555 = vpop.f32.mrb[0].mxu0
    %556 = vmatprep.mubr.f32.mxu0 0.0
    %557 = vmatmul.mubr.f32.gmra.mrb[0].mxu0 %v481
    %v558 = vpop.f32.mrb[0].mxu0
    %v559 = vadd.f32 %v207, %v558
    %v560 = vpop.f32.mrb[0].mxu0
    %561 = vdwg.mxu0
    %vm562 = vcmask 130048
    %v563 = vsel %vm562, %v293, -inf
    %564 = vmax.xlane.f32.xlu0 %v563
    %v565 = vpop.xlane.xlu0 %564
    %v566 = vsel %vm562, %v298, -inf
    %567 = vmax.xlane.f32.xlu0 %v566
    %v568 = vpop.xlane.xlu0 %567
    %v569 = vsel %vm562, %v380, -inf
    %570 = vmax.xlane.f32.xlu0 %v569
    %v571 = vpop.xlane.xlu0 %570
    %v572 = vsel %vm562, %v385, -inf
    %573 = vmax.xlane.f32.xlu0 %v572
    %v574 = vpop.xlane.xlu0 %573
    %v575 = vsel %vm562, %v467, -inf
    %576 = vmax.xlane.f32.xlu0 %v575
    %v577 = vpop.xlane.xlu0 %576
    %v578 = vsel %vm562, %v472, -inf
    %579 = vmax.xlane.f32.xlu0 %v578
    %v580 = vpop.xlane.xlu0 %579
    %v581 = vsel %vm562, %v554, -inf
    %582 = vmax.xlane.f32.xlu0 %v581
    %v583 = vpop.xlane.xlu0 %582
    %v584 = vsel %vm562, %v559, -inf
    %585 = vmax.xlane.f32.xlu0 %v584
    %v586 = vpop.xlane.xlu0 %585
    %v587 = vsub.f32 %v293, %v565
    %v588 = vsub.f32 %v298, %v568
    %v589 = vsub.f32 %v380, %v571
    %v590 = vsub.f32 %v385, %v574
    %v591 = vsub.f32 %v467, %v577
    %v592 = vsub.f32 %v472, %v580
    %v593 = vsub.f32 %v554, %v583
    %v594 = vsub.f32 %v559, %v586
    %v595 = vmul.f32 %v587, 1.442695
    %v596 = vpow.pop %v595
    %v597 = vmul.f32 %v588, 1.442695
    %v598 = vpow.pop %v597
    %v599 = vmul.f32 %v589, 1.442695
    %v600 = vpow.pop %v599
    %v601 = vmul.f32 %v590, 1.442695
    %v602 = vpow.pop %v601
    %v603 = vmul.f32 %v591, 1.442695
    %v604 = vpow.pop %v603
    %v605 = vmul.f32 %v592, 1.442695
    %v606 = vpow.pop %v605
    %v607 = vmul.f32 %v593, 1.442695
    %v608 = vpow.pop %v607
    %v609 = vmul.f32 %v594, 1.442695
    %v610 = vpow.pop %v609
    %611 = vrot.lane.b32.xlu0 %v184, 64
    %v612 = vpop.permute.xlu0 %611
    %613 = vrot.lane.b32.xlu0 %v189, 64
    %v614 = vpop.permute.xlu0 %613
    %v618 = vsel %vm562, %v596, 0
    %v621 = vsel %vm562, %v598, 0
    %623 = vmatprep.subr.mxu0 0.0
    %624 = vmatpush1.msra.mxu0 %v612
    %625 = vmatprep.subr.mxu0 0.0
    %626 = vmatpush1.msra.mxu0 %v614
    %627 = vmatprep.subr.mxu0 0.0
    %628 = vmatpush1.msra.mxu0 0.0
    %629 = vmatprep.subr.mxu0 0.0
    %630 = vmatpush1.msra.mxu0 0.0
    %631 = vmatprep.subr.mxu0 0.0
    %632 = vmatpush1.msra.mxu0 0.0
    %633 = vmatprep.subr.mxu0 0.0
    %634 = vmatpush1.msra.mxu0 0.0
    %635 = vmatprep.subr.mxu0 0.0
    %636 = vmatpush1.msra.mxu0 0.0
    %637 = vmatprep.subr.mxu0 0.0
    %638 = vmatpush1.msra.mxu0 0.0
    %639 = vmatprep.subr.mxu0 0.0
    %640 = vmatpush1.msra.mxu0 0.0
    %641 = vmatprep.subr.mxu0 0.0
    %642 = vmatpush1.msra.mxu0 0.0
    %643 = vmatprep.subr.mxu0 0.0
    %644 = vmatpush1.msra.mxu0 0.0
    %645 = vmatprep.subr.mxu0 0.0
    %646 = vmatpush1.msra.mxu0 0.0
    %647 = vmatprep.subr.mxu0 0.0
    %648 = vmatpush1.msra.mxu0 0.0
    %649 = vmatprep.subr.mxu0 0.0
    %650 = vmatpush1.msra.mxu0 0.0
    %651 = vmatprep.subr.mxu0 0.0
    %652 = vmatpush1.msra.mxu0 0.0
    %653 = vmatprep.subr.mxu0 0.0
    %654 = vmatpush1.msra.mxu0 0.0
    %655 = vmatprep.subr.mxu0 0.0
    %656 = vmatpush1.msra.mxu0 0.0
    %657 = vmatprep.subr.mxu0 0.0
    %658 = vmatpush1.msra.mxu0 0.0
    %659 = vmatprep.subr.mxu0 0.0
    %660 = vmatpush1.msra.mxu0 0.0
    %661 = vmatprep.subr.mxu0 0.0
    %662 = vmatpush1.msra.mxu0 0.0
    %663 = vmatprep.subr.mxu0 0.0
    %664 = vmatpush1.msra.mxu0 0.0
    %665 = vmatprep.subr.mxu0 0.0
    %666 = vmatpush1.msra.mxu0 0.0
    %667 = vmatprep.subr.mxu0 0.0
    %668 = vmatpush1.msra.mxu0 0.0
    %669 = vmatprep.subr.mxu0 0.0
    %670 = vmatpush1.msra.mxu0 0.0
    %671 = vmatprep.subr.mxu0 0.0
    %672 = vmatpush1.msra.mxu0 0.0
    %673 = vmatprep.subr.mxu0 0.0
    %674 = vmatpush1.msra.mxu0 0.0
    %675 = vmatprep.subr.mxu0 0.0
    %676 = vmatpush1.msra.mxu0 0.0
    %677 = vmatprep.subr.mxu0 0.0
    %678 = vmatpush1.msra.mxu0 0.0
    %679 = vmatprep.subr.mxu0 0.0
    %680 = vmatpush1.msra.mxu0 0.0
    %681 = vmatprep.subr.mxu0 0.0
    %682 = vmatpush1.msra.mxu0 0.0
    %683 = vmatprep.subr.mxu0 0.0
    %684 = vmatpush1.msra.mxu0 0.0
    %685 = vmatprep.subr.mxu0 0.0
    %686 = vmatpush1.msra.mxu0 0.0
    %687 = vmatprep.mubr.f32.mxu0 0.0
    %688 = vmatmul.mubr.f32.gmra.mrb[0].mxu0 %v618
    %v689 = vpop.f32.mrb[0].mxu0
    %v690 = vadd.f32 0.0, %v689
    %v691 = vpop.f32.mrb[0].mxu0
    %692 = vmatprep.mubr.f32.mxu0 0.0
    %693 = vmatmul.mubr.f32.gmra.mrb[0].mxu0 %v621
    %v694 = vpop.f32.mrb[0].mxu0
    %v695 = vadd.f32 0.0, %v694
    %v696 = vpop.f32.mrb[0].mxu0
    %697 = vdwg.mxu0
    %698 = vrot.lane.b32.xlu0 %v195, 64
    %v699 = vpop.permute.xlu0 %698
    %700 = vrot.lane.b32.xlu0 %v197, 64
    %v701 = vpop.permute.xlu0 %700
    %v705 = vsel %vm562, %v600, 0
    %v708 = vsel %vm562, %v602, 0
    %710 = vmatprep.subr.mxu0 0.0
    %711 = vmatpush1.msra.mxu0 %v699
    %712 = vmatprep.subr.mxu0 0.0
    %713 = vmatpush1.msra.mxu0 %v701
    %714 = vmatprep.subr.mxu0 0.0
    %715 = vmatpush1.msra.mxu0 0.0
    %716 = vmatprep.subr.mxu0 0.0
    %717 = vmatpush1.msra.mxu0 0.0
    %718 = vmatprep.subr.mxu0 0.0
    %719 = vmatpush1.msra.mxu0 0.0
    %720 = vmatprep.subr.mxu0 0.0
    %721 = vmatpush1.msra.mxu0 0.0
    %722 = vmatprep.subr.mxu0 0.0
    %723 = vmatpush1.msra.mxu0 0.0
    %724 = vmatprep.subr.mxu0 0.0
    %725 = vmatpush1.msra.mxu0 0.0
    %726 = vmatprep.subr.mxu0 0.0
    %727 = vmatpush1.msra.mxu0 0.0
    %728 = vmatprep.subr.mxu0 0.0
    %729 = vmatpush1.msra.mxu0 0.0
    %730 = vmatprep.subr.mxu0 0.0
    %731 = vmatpush1.msra.mxu0 0.0
    %732 = vmatprep.subr.mxu0 0.0
    %733 = vmatpush1.msra.mxu0 0.0
    %734 = vmatprep.subr.mxu0 0.0
    %735 = vmatpush1.msra.mxu0 0.0
    %736 = vmatprep.subr.mxu0 0.0
    %737 = vmatpush1.msra.mxu0 0.0
    %738 = vmatprep.subr.mxu0 0.0
    %739 = vmatpush1.msra.mxu0 0.0
    %740 = vmatprep.subr.mxu0 0.0
    %741 = vmatpush1.msra.mxu0 0.0
    %742 = vmatprep.subr.mxu0 0.0
    %743 = vmatpush1.msra.mxu0 0.0
    %744 = vmatprep.subr.mxu0 0.0
    %745 = vmatpush1.msra.mxu0 0.0
    %746 = vmatprep.subr.mxu0 0.0
    %747 = vmatpush1.msra.mxu0 0.0
    %748 = vmatprep.subr.mxu0 0.0
    %749 = vmatpush1.msra.mxu0 0.0
    %750 = vmatprep.subr.mxu0 0.0
    %751 = vmatpush1.msra.mxu0 0.0
    %752 = vmatprep.subr.mxu0 0.0
    %753 = vmatpush1.msra.mxu0 0.0
    %754 = vmatprep.subr.mxu0 0.0
    %755 = vmatpush1.msra.mxu0 0.0
    %756 = vmatprep.subr.mxu0 0.0
    %757 = vmatpush1.msra.mxu0 0.0
    %758 = vmatprep.subr.mxu0 0.0
    %759 = vmatpush1.msra.mxu0 0.0
    %760 = vmatprep.subr.mxu0 0.0
    %761 = vmatpush1.msra.mxu0 0.0
    %762 = vmatprep.subr.mxu0 0.0
    %763 = vmatpush1.msra.mxu0 0.0
    %764 = vmatprep.subr.mxu0 0.0
    %765 = vmatpush1.msra.mxu0 0.0
    %766 = vmatprep.subr.mxu0 0.0
    %767 = vmatpush1.msra.mxu0 0.0
    %768 = vmatprep.subr.mxu0 0.0
    %769 = vmatpush1.msra.mxu0 0.0
    %770 = vmatprep.subr.mxu0 0.0
    %771 = vmatpush1.msra.mxu0 0.0
    %772 = vmatprep.subr.mxu0 0.0
    %773 = vmatpush1.msra.mxu0 0.0
    %774 = vmatprep.mubr.f32.mxu0 0.0
    %775 = vmatmul.mubr.f32.gmra.mrb[0].mxu0 %v705
    %v776 = vpop.f32.mrb[0].mxu0
    %v777 = vadd.f32 0.0, %v776
    %v778 = vpop.f32.mrb[0].mxu0
    %779 = vmatprep.mubr.f32.mxu0 0.0
    %780 = vmatmul.mubr.f32.gmra.mrb[0].mxu0 %v708
    %v781 = vpop.f32.mrb[0].mxu0
    %v782 = vadd.f32 0.0, %v781
    %v783 = vpop.f32.mrb[0].mxu0
    %784 = vdwg.mxu0
    %785 = vrot.lane.b32.xlu0 %v199, 64
    %v786 = vpop.permute.xlu0 %785
    %787 = vrot.lane.b32.xlu0 %v201, 64
    %v788 = vpop.permute.xlu0 %787
    %v792 = vsel %vm562, %v604, 0
    %v795 = vsel %vm562, %v606, 0
    %797 = vmatprep.subr.mxu0 0.0
    %798 = vmatpush1.msra.mxu0 %v786
    %799 = vmatprep.subr.mxu0 0.0
    %800 = vmatpush1.msra.mxu0 %v788
    %801 = vmatprep.subr.mxu0 0.0
    %802 = vmatpush1.msra.mxu0 0.0
    %803 = vmatprep.subr.mxu0 0.0
    %804 = vmatpush1.msra.mxu0 0.0
    %805 = vmatprep.subr.mxu0 0.0
    %806 = vmatpush1.msra.mxu0 0.0
    %807 = vmatprep.subr.mxu0 0.0
    %808 = vmatpush1.msra.mxu0 0.0
    %809 = vmatprep.subr.mxu0 0.0
    %810 = vmatpush1.msra.mxu0 0.0
    %811 = vmatprep.subr.mxu0 0.0
    %812 = vmatpush1.msra.mxu0 0.0
    %813 = vmatprep.subr.mxu0 0.0
    %814 = vmatpush1.msra.mxu0 0.0
    %815 = vmatprep.subr.mxu0 0.0
    %816 = vmatpush1.msra.mxu0 0.0
    %817 = vmatprep.subr.mxu0 0.0
    %818 = vmatpush1.msra.mxu0 0.0
    %819 = vmatprep.subr.mxu0 0.0
    %820 = vmatpush1.msra.mxu0 0.0
    %821 = vmatprep.subr.mxu0 0.0
    %822 = vmatpush1.msra.mxu0 0.0
    %823 = vmatprep.subr.mxu0 0.0
    %824 = vmatpush1.msra.mxu0 0.0
    %825 = vmatprep.subr.mxu0 0.0
    %826 = vmatpush1.msra.mxu0 0.0
    %827 = vmatprep.subr.mxu0 0.0
    %828 = vmatpush1.msra.mxu0 0.0
    %829 = vmatprep.subr.mxu0 0.0
    %830 = vmatpush1.msra.mxu0 0.0
    %831 = vmatprep.subr.mxu0 0.0
    %832 = vmatpush1.msra.mxu0 0.0
    %833 = vmatprep.subr.mxu0 0.0
    %834 = vmatpush1.msra.mxu0 0.0
    %835 = vmatprep.subr.mxu0 0.0
    %836 = vmatpush1.msra.mxu0 0.0
    %837 = vmatprep.subr.mxu0 0.0
    %838 = vmatpush1.msra.mxu0 0.0
    %839 = vmatprep.subr.mxu0 0.0
    %840 = vmatpush1.msra.mxu0 0.0
    %841 = vmatprep.subr.mxu0 0.0
    %842 = vmatpush1.msra.mxu0 0.0
    %843 = vmatprep.subr.mxu0 0.0
    %844 = vmatpush1.msra.mxu0 0.0
    %845 = vmatprep.subr.mxu0 0.0
    %846 = vmatpush1.msra.mxu0 0.0
    %847 = vmatprep.subr.mxu0 0.0
    %848 = vmatpush1.msra.mxu0 0.0
    %849 = vmatprep.subr.mxu0 0.0
    %850 = vmatpush1.msra.mxu0 0.0
    %851 = vmatprep.subr.mxu0 0.0
    %852 = vmatpush1.msra.mxu0 0.0
    %853 = vmatprep.subr.mxu0 0.0
    %854 = vmatpush1.msra.mxu0 0.0
    %855 = vmatprep.subr.mxu0 0.0
    %856 = vmatpush1.msra.mxu0 0.0
    %857 = vmatprep.subr.mxu0 0.0
    %858 = vmatpush1.msra.mxu0 0.0
    %859 = vmatprep.subr.mxu0 0.0
    %860 = vmatpush1.msra.mxu0 0.0
    %861 = vmatprep.mubr.f32.mxu0 0.0
    %862 = vmatmul.mubr.f32.gmra.mrb[0].mxu0 %v792
    %v863 = vpop.f32.mrb[0].mxu0
    %v864 = vadd.f32 0.0, %v863
    %v865 = vpop.f32.mrb[0].mxu0
    %866 = vmatprep.mubr.f32.mxu0 0.0
    %867 = vmatmul.mubr.f32.gmra.mrb[0].mxu0 %v795
    %v868 = vpop.f32.mrb[0].mxu0
    %v869 = vadd.f32 0.0, %v868
    %v870 = vpop.f32.mrb[0].mxu0
    %871 = vdwg.mxu0
    %872 = vrot.lane.b32.xlu0 %v203, 64
    %v873 = vpop.permute.xlu0 %872
    %874 = vrot.lane.b32.xlu0 %v205, 64
    %v875 = vpop.permute.xlu0 %874
    %v879 = vsel %vm562, %v608, 0
    %v882 = vsel %vm562, %v610, 0
    %884 = vmatprep.subr.mxu0 0.0
    %885 = vmatpush1.msra.mxu0 %v873
    %886 = vmatprep.subr.mxu0 0.0
    %887 = vmatpush1.msra.mxu0 %v875
    %888 = vmatprep.subr.mxu0 0.0
    %889 = vmatpush1.msra.mxu0 0.0
    %890 = vmatprep.subr.mxu0 0.0
    %891 = vmatpush1.msra.mxu0 0.0
    %892 = vmatprep.subr.mxu0 0.0
    %893 = vmatpush1.msra.mxu0 0.0
    %894 = vmatprep.subr.mxu0 0.0
    %895 = vmatpush1.msra.mxu0 0.0
    %896 = vmatprep.subr.mxu0 0.0
    %897 = vmatpush1.msra.mxu0 0.0
    %898 = vmatprep.subr.mxu0 0.0
    %899 = vmatpush1.msra.mxu0 0.0
    %900 = vmatprep.subr.mxu0 0.0
    %901 = vmatpush1.msra.mxu0 0.0
    %902 = vmatprep.subr.mxu0 0.0
    %903 = vmatpush1.msra.mxu0 0.0
    %904 = vmatprep.subr.mxu0 0.0
    %905 = vmatpush1.msra.mxu0 0.0
    %906 = vmatprep.subr.mxu0 0.0
    %907 = vmatpush1.msra.mxu0 0.0
    %908 = vmatprep.subr.mxu0 0.0
    %909 = vmatpush1.msra.mxu0 0.0
    %910 = vmatprep.subr.mxu0 0.0
    %911 = vmatpush1.msra.mxu0 0.0
    %912 = vmatprep.subr.mxu0 0.0
    %913 = vmatpush1.msra.mxu0 0.0
    %914 = vmatprep.subr.mxu0 0.0
    %915 = vmatpush1.msra.mxu0 0.0
    %916 = vmatprep.subr.mxu0 0.0
    %917 = vmatpush1.msra.mxu0 0.0
    %918 = vmatprep.subr.mxu0 0.0
    %919 = vmatpush1.msra.mxu0 0.0
    %920 = vmatprep.subr.mxu0 0.0
    %921 = vmatpush1.msra.mxu0 0.0
    %922 = vmatprep.subr.mxu0 0.0
    %923 = vmatpush1.msra.mxu0 0.0
    %924 = vmatprep.subr.mxu0 0.0
    %925 = vmatpush1.msra.mxu0 0.0
    %926 = vmatprep.subr.mxu0 0.0
    %927 = vmatpush1.msra.mxu0 0.0
    %928 = vmatprep.subr.mxu0 0.0
    %929 = vmatpush1.msra.mxu0 0.0
    %930 = vmatprep.subr.mxu0 0.0
    %931 = vmatpush1.msra.mxu0 0.0
    %932 = vmatprep.subr.mxu0 0.0
    %933 = vmatpush1.msra.mxu0 0.0
    %934 = vmatprep.subr.mxu0 0.0
    %935 = vmatpush1.msra.mxu0 0.0
    %936 = vmatprep.subr.mxu0 0.0
    %937 = vmatpush1.msra.mxu0 0.0
    %938 = vmatprep.subr.mxu0 0.0
    %939 = vmatpush1.msra.mxu0 0.0
    %940 = vmatprep.subr.mxu0 0.0
    %941 = vmatpush1.msra.mxu0 0.0
    %942 = vmatprep.subr.mxu0 0.0
    %943 = vmatpush1.msra.mxu0 0.0
    %944 = vmatprep.subr.mxu0 0.0
    %945 = vmatpush1.msra.mxu0 0.0
    %946 = vmatprep.subr.mxu0 0.0
    %947 = vmatpush1.msra.mxu0 0.0
    %948 = vmatprep.mubr.f32.mxu0 0.0
    %949 = vmatmul.mubr.f32.gmra.mrb[0].mxu0 %v879
    %v950 = vpop.f32.mrb[0].mxu0
    %v951 = vadd.f32 0.0, %v950
    %v952 = vpop.f32.mrb[0].mxu0
    %953 = vmatprep.mubr.f32.mxu0 0.0
    %954 = vmatmul.mubr.f32.gmra.mrb[0].mxu0 %v882
    %v955 = vpop.f32.mrb[0].mxu0
    %v956 = vadd.f32 0.0, %v955
    %v957 = vpop.f32.mrb[0].mxu0
    %958 = vdwg.mxu0
    %v959 = vsel %vm562, %v596, 0.0
    %960 = vadd.xlane.f32.xlu0 %v959
    %v961 = vpop.xlane.xlu0 %960
    %v962 = vsel %vm562, %v598, 0.0
    %963 = vadd.xlane.f32.xlu0 %v962
    %v964 = vpop.xlane.xlu0 %963
    %v965 = vsel %vm562, %v600, 0.0
    %966 = vadd.xlane.f32.xlu0 %v965
    %v967 = vpop.xlane.xlu0 %966
    %v968 = vsel %vm562, %v602, 0.0
    %969 = vadd.xlane.f32.xlu0 %v968
    %v970 = vpop.xlane.xlu0 %969
    %v971 = vsel %vm562, %v604, 0.0
    %972 = vadd.xlane.f32.xlu0 %v971
    %v973 = vpop.xlane.xlu0 %972
    %v974 = vsel %vm562, %v606, 0.0
    %975 = vadd.xlane.f32.xlu0 %v974
    %v976 = vpop.xlane.xlu0 %975
    %v977 = vsel %vm562, %v608, 0.0
    %978 = vadd.xlane.f32.xlu0 %v977
    %v979 = vpop.xlane.xlu0 %978
    %v980 = vsel %vm562, %v610, 0.0
    %981 = vadd.xlane.f32.xlu0 %v980
    %v982 = vpop.xlane.xlu0 %981
    %v983 = vrcp.pop %v961
    %v984 = vmul.f32 %v690, %v983
    %v985 = vrcp.pop %v964
    %v986 = vmul.f32 %v695, %v985
    %v987 = vrcp.pop %v967
    %v988 = vmul.f32 %v777, %v987
    %v989 = vrcp.pop %v970
    %v990 = vmul.f32 %v782, %v989
    %v991 = vrcp.pop %v973
    %v992 = vmul.f32 %v864, %v991
    %v993 = vrcp.pop %v976
    %v994 = vmul.f32 %v869, %v993
    %v995 = vrcp.pop %v979
    %v996 = vmul.f32 %v951, %v995
    %v997 = vrcp.pop %v982
    %v998 = vmul.f32 %v956, %v997
    %1001 = vrot.lane.b32.xlu0 %v988, 8
    %v1002 = vpop.permute.xlu0 %1001
    %1003 = vrot.lane.b32.xlu0 %v990, 8
    %v1004 = vpop.permute.xlu0 %1003
    %1009 = vrot.lane.b32.xlu0 %v992, 16
    %v1010 = vpop.permute.xlu0 %1009
    %1011 = vrot.lane.b32.xlu0 %v994, 16
    %v1012 = vpop.permute.xlu0 %1011
    %1017 = vrot.lane.b32.xlu0 %v996, 24
    %v1018 = vpop.permute.xlu0 %1017
    %1019 = vrot.lane.b32.xlu0 %v998, 24
    %v1020 = vpop.permute.xlu0 %1019
    %v1023 = vsel %vm217, %v984, %v1002
    %v1024 = vsel %vm217, %v986, %v1004
    %v1025 = vsel %vm562, %v1023, %v1010
    %v1026 = vsel %vm562, %v1024, %v1012
    %vm1027 = vcmask 195584
    %v1028 = vsel %vm1027, %v1025, %v1018
    %v1029 = vsel %vm1027, %v1026, %v1020
    %v1031 = vlaneseq
    %v1032 = vshrl.u32 %v1031, 7
    %v1033 = vsub.s32 0, %v1032
    %v1034 = vrot.slane %v212, %v1033
    %v1037 = vsel %vm110, %v1028, 0
    %v1040 = vsel %vm110, %v1029, 0
    %1042 = vmatprep.subr.mxu0 0.0
    %1043 = vmatpush1.msra.mxu0 %v208
    %1044 = vmatprep.subr.mxu0 0.0
    %1045 = vmatpush1.msra.mxu0 %v209
    %1046 = vmatprep.subr.mxu0 0.0
    %1047 = vmatpush1.msra.mxu0 %v210
    %1048 = vmatprep.subr.mxu0 0.0
    %1049 = vmatpush1.msra.mxu0 %v211
    %1050 = vmatprep.subr.mxu0 0.0
    %1051 = vmatpush1.msra.mxu0 0.0
    %1052 = vmatprep.subr.mxu0 0.0
    %1053 = vmatpush1.msra.mxu0 0.0
    %1054 = vmatprep.subr.mxu0 0.0
    %1055 = vmatpush1.msra.mxu0 0.0
    %1056 = vmatprep.subr.mxu0 0.0
    %1057 = vmatpush1.msra.mxu0 0.0
    %1058 = vmatprep.subr.mxu0 0.0
    %1059 = vmatpush1.msra.mxu0 0.0
    %1060 = vmatprep.subr.mxu0 0.0
    %1061 = vmatpush1.msra.mxu0 0.0
    %1062 = vmatprep.subr.mxu0 0.0
    %1063 = vmatpush1.msra.mxu0 0.0
    %1064 = vmatprep.subr.mxu0 0.0
    %1065 = vmatpush1.msra.mxu0 0.0
    %1066 = vmatprep.subr.mxu0 0.0
    %1067 = vmatpush1.msra.mxu0 0.0
    %1068 = vmatprep.subr.mxu0 0.0
    %1069 = vmatpush1.msra.mxu0 0.0
    %1070 = vmatprep.subr.mxu0 0.0
    %1071 = vmatpush1.msra.mxu0 0.0
    %1072 = vmatprep.subr.mxu0 0.0
    %1073 = vmatpush1.msra.mxu0 0.0
    %1074 = vmatprep.subr.mxu0 0.0
    %1075 = vmatpush1.msra.mxu0 0.0
    %1076 = vmatprep.subr.mxu0 0.0
    %1077 = vmatpush1.msra.mxu0 0.0
    %1078 = vmatprep.subr.mxu0 0.0
    %1079 = vmatpush1.msra.mxu0 0.0
    %1080 = vmatprep.subr.mxu0 0.0
    %1081 = vmatpush1.msra.mxu0 0.0
    %1082 = vmatprep.subr.mxu0 0.0
    %1083 = vmatpush1.msra.mxu0 0.0
    %1084 = vmatprep.subr.mxu0 0.0
    %1085 = vmatpush1.msra.mxu0 0.0
    %1086 = vmatprep.subr.mxu0 0.0
    %1087 = vmatpush1.msra.mxu0 0.0
    %1088 = vmatprep.subr.mxu0 0.0
    %1089 = vmatpush1.msra.mxu0 0.0
    %1090 = vmatprep.subr.mxu0 0.0
    %1091 = vmatpush1.msra.mxu0 0.0
    %1092 = vmatprep.subr.mxu0 0.0
    %1093 = vmatpush1.msra.mxu0 0.0
    %1094 = vmatprep.subr.mxu0 0.0
    %1095 = vmatpush1.msra.mxu0 0.0
    %1096 = vmatprep.subr.mxu0 0.0
    %1097 = vmatpush1.msra.mxu0 0.0
    %1098 = vmatprep.subr.mxu0 0.0
    %1099 = vmatpush1.msra.mxu0 0.0
    %1100 = vmatprep.subr.mxu0 0.0
    %1101 = vmatpush1.msra.mxu0 0.0
    %1102 = vmatprep.subr.mxu0 0.0
    %1103 = vmatpush1.msra.mxu0 0.0
    %1104 = vmatprep.subr.mxu0 0.0
    %1105 = vmatpush1.msra.mxu0 0.0
    %1106 = vmatprep.mubr.f32.mxu0 0.0
    %1107 = vmatmul.mubr.f32.gmra.mrb[0].mxu0 %v1037
    %v1108 = vpop.f32.mrb[0].mxu0
    %v1109 = vadd.f32 %v1034, %v1108
    %v1110 = vpop.f32.mrb[0].mxu0
    %1111 = vmatprep.mubr.f32.mxu0 0.0
    %1112 = vmatmul.mubr.f32.gmra.mrb[0].mxu0 %v1040
    %v1113 = vpop.f32.mrb[0].mxu0
    %v1114 = vadd.f32 %v1034, %v1113
    %v1115 = vpop.f32.mrb[0].mxu0
    %1116 = vdwg.mxu0
    %v1117 = vadd.f32 %v95, %v1109
    %v1118 = vadd.f32 %v96, %v1114
    %s1119 = scalar_lea.vmem [#allocation2], 32
    %v1120 = vld [vmem:[%s1119] sm:$0xff]
    %v1121 = vld [vmem:[%s1119 + $0x8] sm:$0xff]
    %v1122 = vld [vmem:[%s1119 + $0x10] sm:$0xff]
    %v1123 = vld [vmem:[%s1119 + $0x18] sm:$0xff]
    %s1124 = scalar_lea.vmem %s5, 1
    %v1125 = vld [vmem:[%s1124] sm:$0x1]
    %v1127 = vlaneseq
    %v1128 = vshrl.u32 %v1127, 7
    %v1129 = vsub.s32 0, %v1128
    %v1130 = vrot.slane %v1125, %v1129
    %v1133 = vsel %vm110, %v1117, 0
    %v1136 = vsel %vm110, %v1118, 0
    %1138 = vmatprep.subr.mxu0 0.0
    %1139 = vmatpush1.msra.mxu0 %v1120
    %1140 = vmatprep.subr.mxu0 0.0
    %1141 = vmatpush1.msra.mxu0 %v1121
    %1142 = vmatprep.subr.mxu0 0.0
    %1143 = vmatpush1.msra.mxu0 %v1122
    %1144 = vmatprep.subr.mxu0 0.0
    %1145 = vmatpush1.msra.mxu0 %v1123
    %1146 = vmatprep.subr.mxu0 0.0
    %1147 = vmatpush1.msra.mxu0 0.0
    %1148 = vmatprep.subr.mxu0 0.0
    %1149 = vmatpush1.msra.mxu0 0.0
    %1150 = vmatprep.subr.mxu0 0.0
    %1151 = vmatpush1.msra.mxu0 0.0
    %1152 = vmatprep.subr.mxu0 0.0
    %1153 = vmatpush1.msra.mxu0 0.0
    %1154 = vmatprep.subr.mxu0 0.0
    %1155 = vmatpush1.msra.mxu0 0.0
    %1156 = vmatprep.subr.mxu0 0.0
    %1157 = vmatpush1.msra.mxu0 0.0
    %1158 = vmatprep.subr.mxu0 0.0
    %1159 = vmatpush1.msra.mxu0 0.0
    %1160 = vmatprep.subr.mxu0 0.0
    %1161 = vmatpush1.msra.mxu0 0.0
    %1162 = vmatprep.subr.mxu0 0.0
    %1163 = vmatpush1.msra.mxu0 0.0
    %1164 = vmatprep.subr.mxu0 0.0
    %1165 = vmatpush1.msra.mxu0 0.0
    %1166 = vmatprep.subr.mxu0 0.0
    %1167 = vmatpush1.msra.mxu0 0.0
    %1168 = vmatprep.subr.mxu0 0.0
    %1169 = vmatpush1.msra.mxu0 0.0
    %1170 = vmatprep.subr.mxu0 0.0
    %1171 = vmatpush1.msra.mxu0 0.0
    %1172 = vmatprep.subr.mxu0 0.0
    %1173 = vmatpush1.msra.mxu0 0.0
    %1174 = vmatprep.subr.mxu0 0.0
    %1175 = vmatpush1.msra.mxu0 0.0
    %1176 = vmatprep.subr.mxu0 0.0
    %1177 = vmatpush1.msra.mxu0 0.0
    %1178 = vmatprep.subr.mxu0 0.0
    %1179 = vmatpush1.msra.mxu0 0.0
    %1180 = vmatprep.subr.mxu0 0.0
    %1181 = vmatpush1.msra.mxu0 0.0
    %1182 = vmatprep.subr.mxu0 0.0
    %1183 = vmatpush1.msra.mxu0 0.0
    %1184 = vmatprep.subr.mxu0 0.0
    %1185 = vmatpush1.msra.mxu0 0.0
    %1186 = vmatprep.subr.mxu0 0.0
    %1187 = vmatpush1.msra.mxu0 0.0
    %1188 = vmatprep.subr.mxu0 0.0
    %1189 = vmatpush1.msra.mxu0 0.0
    %1190 = vmatprep.subr.mxu0 0.0
    %1191 = vmatpush1.msra.mxu0 0.0
    %1192 = vmatprep.subr.mxu0 0.0
    %1193 = vmatpush1.msra.mxu0 0.0
    %1194 = vmatprep.subr.mxu0 0.0
    %1195 = vmatpush1.msra.mxu0 0.0
    %1196 = vmatprep.subr.mxu0 0.0
    %1197 = vmatpush1.msra.mxu0 0.0
    %1198 = vmatprep.subr.mxu0 0.0
    %1199 = vmatpush1.msra.mxu0 0.0
    %1200 = vmatprep.subr.mxu0 0.0
    %1201 = vmatpush1.msra.mxu0 0.0
    %1202 = vmatprep.mubr.f32.mxu0 0.0
    %1203 = vmatmul.mubr.f32.gmra.mrb[0].mxu0 %v1133
    %v1204 = vpop.f32.mrb[0].mxu0
    %v1205 = vadd.f32 %v1130, %v1204
    %v1206 = vpop.f32.mrb[0].mxu0
    %1207 = vmatprep.mubr.f32.mxu0 0.0
    %1208 = vmatmul.mubr.f32.gmra.mrb[0].mxu0 %v1136
    %v1209 = vpop.f32.mrb[0].mxu0
    %v1210 = vadd.f32 %v1130, %v1209
    %v1211 = vpop.f32.mrb[0].mxu0
    %1212 = vdwg.mxu0
    %1217 = vrot.lane.b32.xlu0 %v1120, 96
    %v1218 = vpop.permute.xlu0 %1217
    %1219 = vrot.lane.b32.xlu0 %v1121, 96
    %v1220 = vpop.permute.xlu0 %1219
    %1221 = vrot.lane.b32.xlu0 %v1122, 96
    %v1222 = vpop.permute.xlu0 %1221
    %1223 = vrot.lane.b32.xlu0 %v1123, 96
    %v1224 = vpop.permute.xlu0 %1223
    %1229 = vrot.lane.b32.xlu0 %v1130, 96
    %v1230 = vpop.permute.xlu0 %1229
    %v1233 = vsel %vm110, %v97, 0
    %v1236 = vsel %vm110, %v98, 0
    %1238 = vmatprep.subr.mxu0 0.0
    %1239 = vmatpush1.msra.mxu0 %v1218
    %1240 = vmatprep.subr.mxu0 0.0
    %1241 = vmatpush1.msra.mxu0 %v1220
    %1242 = vmatprep.subr.mxu0 0.0
    %1243 = vmatpush1.msra.mxu0 %v1222
    %1244 = vmatprep.subr.mxu0 0.0
    %1245 = vmatpush1.msra.mxu0 %v1224
    %1246 = vmatprep.subr.mxu0 0.0
    %1247 = vmatpush1.msra.mxu0 0.0
    %1248 = vmatprep.subr.mxu0 0.0
    %1249 = vmatpush1.msra.mxu0 0.0
    %1250 = vmatprep.subr.mxu0 0.0
    %1251 = vmatpush1.msra.mxu0 0.0
    %1252 = vmatprep.subr.mxu0 0.0
    %1253 = vmatpush1.msra.mxu0 0.0
    %1254 = vmatprep.subr.mxu0 0.0
    %1255 = vmatpush1.msra.mxu0 0.0
    %1256 = vmatprep.subr.mxu0 0.0
    %1257 = vmatpush1.msra.mxu0 0.0
    %1258 = vmatprep.subr.mxu0 0.0
    %1259 = vmatpush1.msra.mxu0 0.0
    %1260 = vmatprep.subr.mxu0 0.0
    %1261 = vmatpush1.msra.mxu0 0.0
    %1262 = vmatprep.subr.mxu0 0.0
    %1263 = vmatpush1.msra.mxu0 0.0
    %1264 = vmatprep.subr.mxu0 0.0
    %1265 = vmatpush1.msra.mxu0 0.0
    %1266 = vmatprep.subr.mxu0 0.0
    %1267 = vmatpush1.msra.mxu0 0.0
    %1268 = vmatprep.subr.mxu0 0.0
    %1269 = vmatpush1.msra.mxu0 0.0
    %1270 = vmatprep.subr.mxu0 0.0
    %1271 = vmatpush1.msra.mxu0 0.0
    %1272 = vmatprep.subr.mxu0 0.0
    %1273 = vmatpush1.msra.mxu0 0.0
    %1274 = vmatprep.subr.mxu0 0.0
    %1275 = vmatpush1.msra.mxu0 0.0
    %1276 = vmatprep.subr.mxu0 0.0
    %1277 = vmatpush1.msra.mxu0 0.0
    %1278 = vmatprep.subr.mxu0 0.0
    %1279 = vmatpush1.msra.mxu0 0.0
    %1280 = vmatprep.subr.mxu0 0.0
    %1281 = vmatpush1.msra.mxu0 0.0
    %1282 = vmatprep.subr.mxu0 0.0
    %1283 = vmatpush1.msra.mxu0 0.0
    %1284 = vmatprep.subr.mxu0 0.0
    %1285 = vmatpush1.msra.mxu0 0.0
    %1286 = vmatprep.subr.mxu0 0.0
    %1287 = vmatpush1.msra.mxu0 0.0
    %1288 = vmatprep.subr.mxu0 0.0
    %1289 = vmatpush1.msra.mxu0 0.0
    %1290 = vmatprep.subr.mxu0 0.0
    %1291 = vmatpush1.msra.mxu0 0.0
    %1292 = vmatprep.subr.mxu0 0.0
    %1293 = vmatpush1.msra.mxu0 0.0
    %1294 = vmatprep.subr.mxu0 0.0
    %1295 = vmatpush1.msra.mxu0 0.0
    %1296 = vmatprep.subr.mxu0 0.0
    %1297 = vmatpush1.msra.mxu0 0.0
    %1298 = vmatprep.subr.mxu0 0.0
    %1299 = vmatpush1.msra.mxu0 0.0
    %1300 = vmatprep.subr.mxu0 0.0
    %1301 = vmatpush1.msra.mxu0 0.0
    %1302 = vmatprep.mubr.f32.mxu0 0.0
    %1303 = vmatmul.mubr.f32.gmra.mrb[0].mxu0 %v1233
    %v1304 = vpop.f32.mrb[0].mxu0
    %v1305 = vadd.f32 %v1230, %v1304
    %v1306 = vpop.f32.mrb[0].mxu0
    %1307 = vmatprep.mubr.f32.mxu0 0.0
    %1308 = vmatmul.mubr.f32.gmra.mrb[0].mxu0 %v1236
    %v1309 = vpop.f32.mrb[0].mxu0
    %v1310 = vadd.f32 %v1230, %v1309
    %v1311 = vpop.f32.mrb[0].mxu0
    %1312 = vdwg.mxu0
    %1315 = vrot.lane.b32.xlu0 %v1205, 120
    %v1316 = vpop.permute.xlu0 %1315
    %1317 = vrot.lane.b32.xlu0 %v1210, 120
    %v1318 = vpop.permute.xlu0 %1317
    %1319 = vrot.lane.b32.xlu0 %v1205, 112
    %v1320 = vpop.permute.xlu0 %1319
    %1321 = vrot.lane.b32.xlu0 %v1210, 112
    %v1322 = vpop.permute.xlu0 %1321
    %1323 = vrot.lane.b32.xlu0 %v1205, 104
    %v1324 = vpop.permute.xlu0 %1323
    %1325 = vrot.lane.b32.xlu0 %v1210, 104
    %v1326 = vpop.permute.xlu0 %1325
    %1329 = vrot.lane.b32.xlu0 %v1305, 120
    %v1330 = vpop.permute.xlu0 %1329
    %1331 = vrot.lane.b32.xlu0 %v1310, 120
    %v1332 = vpop.permute.xlu0 %1331
    %1333 = vrot.lane.b32.xlu0 %v1305, 112
    %v1334 = vpop.permute.xlu0 %1333
    %1335 = vrot.lane.b32.xlu0 %v1310, 112
    %v1336 = vpop.permute.xlu0 %1335
    %1337 = vrot.lane.b32.xlu0 %v1305, 104
    %v1338 = vpop.permute.xlu0 %1337
    %1339 = vrot.lane.b32.xlu0 %v1310, 104
    %v1340 = vpop.permute.xlu0 %1339
    %v1341 = vld [vmem:[%s3] sm:$0xff]
    %v1342 = vld [vmem:[%s3 + $0x8] sm:$0xff]
    %s1343 = scalar_lea.vmem [#allocation5], 32
    %v1344 = vld [vmem:[%s1343] sm:$0xff]
    %v1345 = vld [vmem:[%s1343 + $0x8] sm:$0xff]
    %v1346 = vld [vmem:[%s1343 + $0x10] sm:$0xff]
    %v1347 = vld [vmem:[%s1343 + $0x18] sm:$0xff]
    %s1348 = scalar_lea.vmem [#allocation7], 1
    %v1349 = vld [vmem:[%s1348] sm:$0x1]
    %v1350 = vsel %vm217, %v1205, 0
    %v1352 = vsel %vm217, %v1210, 0
    %v1354 = vsel %vm217, %v1305, 0
    %v1356 = vsel %vm217, %v1310, 0
    %1358 = vmatprep.subr.mxu0 0.0
    %1359 = vmatpush1.xpose.msra.mxu0 %v1354
    %1360 = vmatprep.subr.mxu0 0.0
    %1361 = vmatpush1.xpose.msra.mxu0 %v1356
    %1362 = vmatprep.subr.mxu0 0.0
    %1363 = vmatpush1.xpose.msra.mxu0 0.0
    %1364 = vmatprep.subr.mxu0 0.0
    %1365 = vmatpush1.xpose.msra.mxu0 0.0
    %1366 = vmatprep.subr.mxu0 0.0
    %1367 = vmatpush1.xpose.msra.mxu0 0.0
    %1368 = vmatprep.subr.mxu0 0.0
    %1369 = vmatpush1.xpose.msra.mxu0 0.0
    %1370 = vmatprep.subr.mxu0 0.0
    %1371 = vmatpush1.xpose.msra.mxu0 0.0
    %1372 = vmatprep.subr.mxu0 0.0
    %1373 = vmatpush1.xpose.msra.mxu0 0.0
    %1374 = vmatprep.subr.mxu0 0.0
    %1375 = vmatpush1.xpose.msra.mxu0 0.0
    %1376 = vmatprep.subr.mxu0 0.0
    %1377 = vmatpush1.xpose.msra.mxu0 0.0
    %1378 = vmatprep.subr.mxu0 0.0
    %1379 = vmatpush1.xpose.msra.mxu0 0.0
    %1380 = vmatprep.subr.mxu0 0.0
    %1381 = vmatpush1.xpose.msra.mxu0 0.0
    %1382 = vmatprep.subr.mxu0 0.0
    %1383 = vmatpush1.xpose.msra.mxu0 0.0
    %1384 = vmatprep.subr.mxu0 0.0
    %1385 = vmatpush1.xpose.msra.mxu0 0.0
    %1386 = vmatprep.subr.mxu0 0.0
    %1387 = vmatpush1.xpose.msra.mxu0 0.0
    %1388 = vmatprep.subr.mxu0 0.0
    %1389 = vmatpush1.xpose.msra.mxu0 0.0
    %1390 = vmatprep.subr.mxu0 0.0
    %1391 = vmatpush1.xpose.msra.mxu0 0.0
    %1392 = vmatprep.subr.mxu0 0.0
    %1393 = vmatpush1.xpose.msra.mxu0 0.0
    %1394 = vmatprep.subr.mxu0 0.0
    %1395 = vmatpush1.xpose.msra.mxu0 0.0
    %1396 = vmatprep.subr.mxu0 0.0
    %1397 = vmatpush1.xpose.msra.mxu0 0.0
    %1398 = vmatprep.subr.mxu0 0.0
    %1399 = vmatpush1.xpose.msra.mxu0 0.0
    %1400 = vmatprep.subr.mxu0 0.0
    %1401 = vmatpush1.xpose.msra.mxu0 0.0
    %1402 = vmatprep.subr.mxu0 0.0
    %1403 = vmatpush1.xpose.msra.mxu0 0.0
    %1404 = vmatprep.subr.mxu0 0.0
    %1405 = vmatpush1.xpose.msra.mxu0 0.0
    %1406 = vmatprep.subr.mxu0 0.0
    %1407 = vmatpush1.xpose.msra.mxu0 0.0
    %1408 = vmatprep.subr.mxu0 0.0
    %1409 = vmatpush1.xpose.msra.mxu0 0.0
    %1410 = vmatprep.subr.mxu0 0.0
    %1411 = vmatpush1.xpose.msra.mxu0 0.0
    %1412 = vmatprep.subr.mxu0 0.0
    %1413 = vmatpush1.xpose.msra.mxu0 0.0
    %1414 = vmatprep.subr.mxu0 0.0
    %1415 = vmatpush1.xpose.msra.mxu0 0.0
    %1416 = vmatprep.subr.mxu0 0.0
    %1417 = vmatpush1.xpose.msra.mxu0 0.0
    %1418 = vmatprep.subr.mxu0 0.0
    %1419 = vmatpush1.xpose.msra.mxu0 0.0
    %1420 = vmatprep.subr.mxu0 0.0
    %1421 = vmatpush1.xpose.msra.mxu0 0.0
    %1422 = vmatprep.mubr.f32.mxu0 0.0
    %1423 = vmatmul.mubr.f32.gmra.mrb[0].mxu0 %v1350
    %v1424 = vpop.f32.mrb[0].mxu0
    %v1425 = vadd.f32 %v1341, %v1424
    %v1426 = vpop.f32.mrb[0].mxu0
    %1427 = vmatprep.mubr.f32.mxu0 0.0
    %1428 = vmatmul.mubr.f32.gmra.mrb[0].mxu0 %v1352
    %v1429 = vpop.f32.mrb[0].mxu0
    %v1430 = vadd.f32 %v1342, %v1429
    %v1431 = vpop.f32.mrb[0].mxu0
    %1432 = vdwg.mxu0
    %v1433 = vsel %vm217, %v1316, 0
    %v1435 = vsel %vm217, %v1318, 0
    %v1437 = vsel %vm217, %v1330, 0
    %v1439 = vsel %vm217, %v1332, 0
    %1441 = vmatprep.subr.mxu0 0.0
    %1442 = vmatpush1.xpose.msra.mxu0 %v1437
    %1443 = vmatprep.subr.mxu0 0.0
    %1444 = vmatpush1.xpose.msra.mxu0 %v1439
    %1445 = vmatprep.subr.mxu0 0.0
    %1446 = vmatpush1.xpose.msra.mxu0 0.0
    %1447 = vmatprep.subr.mxu0 0.0
    %1448 = vmatpush1.xpose.msra.mxu0 0.0
    %1449 = vmatprep.subr.mxu0 0.0
    %1450 = vmatpush1.xpose.msra.mxu0 0.0
    %1451 = vmatprep.subr.mxu0 0.0
    %1452 = vmatpush1.xpose.msra.mxu0 0.0
    %1453 = vmatprep.subr.mxu0 0.0
    %1454 = vmatpush1.xpose.msra.mxu0 0.0
    %1455 = vmatprep.subr.mxu0 0.0
    %1456 = vmatpush1.xpose.msra.mxu0 0.0
    %1457 = vmatprep.subr.mxu0 0.0
    %1458 = vmatpush1.xpose.msra.mxu0 0.0
    %1459 = vmatprep.subr.mxu0 0.0
    %1460 = vmatpush1.xpose.msra.mxu0 0.0
    %1461 = vmatprep.subr.mxu0 0.0
    %1462 = vmatpush1.xpose.msra.mxu0 0.0
    %1463 = vmatprep.subr.mxu0 0.0
    %1464 = vmatpush1.xpose.msra.mxu0 0.0
    %1465 = vmatprep.subr.mxu0 0.0
    %1466 = vmatpush1.xpose.msra.mxu0 0.0
    %1467 = vmatprep.subr.mxu0 0.0
    %1468 = vmatpush1.xpose.msra.mxu0 0.0
    %1469 = vmatprep.subr.mxu0 0.0
    %1470 = vmatpush1.xpose.msra.mxu0 0.0
    %1471 = vmatprep.subr.mxu0 0.0
    %1472 = vmatpush1.xpose.msra.mxu0 0.0
    %1473 = vmatprep.subr.mxu0 0.0
    %1474 = vmatpush1.xpose.msra.mxu0 0.0
    %1475 = vmatprep.subr.mxu0 0.0
    %1476 = vmatpush1.xpose.msra.mxu0 0.0
    %1477 = vmatprep.subr.mxu0 0.0
    %1478 = vmatpush1.xpose.msra.mxu0 0.0
    %1479 = vmatprep.subr.mxu0 0.0
    %1480 = vmatpush1.xpose.msra.mxu0 0.0
    %1481 = vmatprep.subr.mxu0 0.0
    %1482 = vmatpush1.xpose.msra.mxu0 0.0
    %1483 = vmatprep.subr.mxu0 0.0
    %1484 = vmatpush1.xpose.msra.mxu0 0.0
    %1485 = vmatprep.subr.mxu0 0.0
    %1486 = vmatpush1.xpose.msra.mxu0 0.0
    %1487 = vmatprep.subr.mxu0 0.0
    %1488 = vmatpush1.xpose.msra.mxu0 0.0
    %1489 = vmatprep.subr.mxu0 0.0
    %1490 = vmatpush1.xpose.msra.mxu0 0.0
    %1491 = vmatprep.subr.mxu0 0.0
    %1492 = vmatpush1.xpose.msra.mxu0 0.0
    %1493 = vmatprep.subr.mxu0 0.0
    %1494 = vmatpush1.xpose.msra.mxu0 0.0
    %1495 = vmatprep.subr.mxu0 0.0
    %1496 = vmatpush1.xpose.msra.mxu0 0.0
    %1497 = vmatprep.subr.mxu0 0.0
    %1498 = vmatpush1.xpose.msra.mxu0 0.0
    %1499 = vmatprep.subr.mxu0 0.0
    %1500 = vmatpush1.xpose.msra.mxu0 0.0
    %1501 = vmatprep.subr.mxu0 0.0
    %1502 = vmatpush1.xpose.msra.mxu0 0.0
    %1503 = vmatprep.subr.mxu0 0.0
    %1504 = vmatpush1.xpose.msra.mxu0 0.0
    %1505 = vmatprep.mubr.f32.mxu0 0.0
    %1506 = vmatmul.mubr.f32.gmra.mrb[0].mxu0 %v1433
    %v1507 = vpop.f32.mrb[0].mxu0
    %v1508 = vadd.f32 %v1341, %v1507
    %v1509 = vpop.f32.mrb[0].mxu0
    %1510 = vmatprep.mubr.f32.mxu0 0.0
    %1511 = vmatmul.mubr.f32.gmra.mrb[0].mxu0 %v1435
    %v1512 = vpop.f32.mrb[0].mxu0
    %v1513 = vadd.f32 %v1342, %v1512
    %v1514 = vpop.f32.mrb[0].mxu0
    %1515 = vdwg.mxu0
    %v1516 = vsel %vm217, %v1320, 0
    %v1518 = vsel %vm217, %v1322, 0
    %v1520 = vsel %vm217, %v1334, 0
    %v1522 = vsel %vm217, %v1336, 0
    %1524 = vmatprep.subr.mxu0 0.0
    %1525 = vmatpush1.xpose.msra.mxu0 %v1520
    %1526 = vmatprep.subr.mxu0 0.0
    %1527 = vmatpush1.xpose.msra.mxu0 %v1522
    %1528 = vmatprep.subr.mxu0 0.0
    %1529 = vmatpush1.xpose.msra.mxu0 0.0
    %1530 = vmatprep.subr.mxu0 0.0
    %1531 = vmatpush1.xpose.msra.mxu0 0.0
    %1532 = vmatprep.subr.mxu0 0.0
    %1533 = vmatpush1.xpose.msra.mxu0 0.0
    %1534 = vmatprep.subr.mxu0 0.0
    %1535 = vmatpush1.xpose.msra.mxu0 0.0
    %1536 = vmatprep.subr.mxu0 0.0
    %1537 = vmatpush1.xpose.msra.mxu0 0.0
    %1538 = vmatprep.subr.mxu0 0.0
    %1539 = vmatpush1.xpose.msra.mxu0 0.0
    %1540 = vmatprep.subr.mxu0 0.0
    %1541 = vmatpush1.xpose.msra.mxu0 0.0
    %1542 = vmatprep.subr.mxu0 0.0
    %1543 = vmatpush1.xpose.msra.mxu0 0.0
    %1544 = vmatprep.subr.mxu0 0.0
    %1545 = vmatpush1.xpose.msra.mxu0 0.0
    %1546 = vmatprep.subr.mxu0 0.0
    %1547 = vmatpush1.xpose.msra.mxu0 0.0
    %1548 = vmatprep.subr.mxu0 0.0
    %1549 = vmatpush1.xpose.msra.mxu0 0.0
    %1550 = vmatprep.subr.mxu0 0.0
    %1551 = vmatpush1.xpose.msra.mxu0 0.0
    %1552 = vmatprep.subr.mxu0 0.0
    %1553 = vmatpush1.xpose.msra.mxu0 0.0
    %1554 = vmatprep.subr.mxu0 0.0
    %1555 = vmatpush1.xpose.msra.mxu0 0.0
    %1556 = vmatprep.subr.mxu0 0.0
    %1557 = vmatpush1.xpose.msra.mxu0 0.0
    %1558 = vmatprep.subr.mxu0 0.0
    %1559 = vmatpush1.xpose.msra.mxu0 0.0
    %1560 = vmatprep.subr.mxu0 0.0
    %1561 = vmatpush1.xpose.msra.mxu0 0.0
    %1562 = vmatprep.subr.mxu0 0.0
    %1563 = vmatpush1.xpose.msra.mxu0 0.0
    %1564 = vmatprep.subr.mxu0 0.0
    %1565 = vmatpush1.xpose.msra.mxu0 0.0
    %1566 = vmatprep.subr.mxu0 0.0
    %1567 = vmatpush1.xpose.msra.mxu0 0.0
    %1568 = vmatprep.subr.mxu0 0.0
    %1569 = vmatpush1.xpose.msra.mxu0 0.0
    %1570 = vmatprep.subr.mxu0 0.0
    %1571 = vmatpush1.xpose.msra.mxu0 0.0
    %1572 = vmatprep.subr.mxu0 0.0
    %1573 = vmatpush1.xpose.msra.mxu0 0.0
    %1574 = vmatprep.subr.mxu0 0.0
    %1575 = vmatpush1.xpose.msra.mxu0 0.0
    %1576 = vmatprep.subr.mxu0 0.0
    %1577 = vmatpush1.xpose.msra.mxu0 0.0
    %1578 = vmatprep.subr.mxu0 0.0
    %1579 = vmatpush1.xpose.msra.mxu0 0.0
    %1580 = vmatprep.subr.mxu0 0.0
    %1581 = vmatpush1.xpose.msra.mxu0 0.0
    %1582 = vmatprep.subr.mxu0 0.0
    %1583 = vmatpush1.xpose.msra.mxu0 0.0
    %1584 = vmatprep.subr.mxu0 0.0
    %1585 = vmatpush1.xpose.msra.mxu0 0.0
    %1586 = vmatprep.subr.mxu0 0.0
    %1587 = vmatpush1.xpose.msra.mxu0 0.0
    %1588 = vmatprep.mubr.f32.mxu0 0.0
    %1589 = vmatmul.mubr.f32.gmra.mrb[0].mxu0 %v1516
    %v1590 = vpop.f32.mrb[0].mxu0
    %v1591 = vadd.f32 %v1341, %v1590
    %v1592 = vpop.f32.mrb[0].mxu0
    %1593 = vmatprep.mubr.f32.mxu0 0.0
    %1594 = vmatmul.mubr.f32.gmra.mrb[0].mxu0 %v1518
    %v1595 = vpop.f32.mrb[0].mxu0
    %v1596 = vadd.f32 %v1342, %v1595
    %v1597 = vpop.f32.mrb[0].mxu0
    %1598 = vdwg.mxu0
    %v1599 = vsel %vm217, %v1324, 0
    %v1601 = vsel %vm217, %v1326, 0
    %v1603 = vsel %vm217, %v1338, 0
    %v1605 = vsel %vm217, %v1340, 0
    %1607 = vmatprep.subr.mxu0 0.0
    %1608 = vmatpush1.xpose.msra.mxu0 %v1603
    %1609 = vmatprep.subr.mxu0 0.0
    %1610 = vmatpush1.xpose.msra.mxu0 %v1605
    %1611 = vmatprep.subr.mxu0 0.0
    %1612 = vmatpush1.xpose.msra.mxu0 0.0
    %1613 = vmatprep.subr.mxu0 0.0
    %1614 = vmatpush1.xpose.msra.mxu0 0.0
    %1615 = vmatprep.subr.mxu0 0.0
    %1616 = vmatpush1.xpose.msra.mxu0 0.0
    %1617 = vmatprep.subr.mxu0 0.0
    %1618 = vmatpush1.xpose.msra.mxu0 0.0
    %1619 = vmatprep.subr.mxu0 0.0
    %1620 = vmatpush1.xpose.msra.mxu0 0.0
    %1621 = vmatprep.subr.mxu0 0.0
    %1622 = vmatpush1.xpose.msra.mxu0 0.0
    %1623 = vmatprep.subr.mxu0 0.0
    %1624 = vmatpush1.xpose.msra.mxu0 0.0
    %1625 = vmatprep.subr.mxu0 0.0
    %1626 = vmatpush1.xpose.msra.mxu0 0.0
    %1627 = vmatprep.subr.mxu0 0.0
    %1628 = vmatpush1.xpose.msra.mxu0 0.0
    %1629 = vmatprep.subr.mxu0 0.0
    %1630 = vmatpush1.xpose.msra.mxu0 0.0
    %1631 = vmatprep.subr.mxu0 0.0
    %1632 = vmatpush1.xpose.msra.mxu0 0.0
    %1633 = vmatprep.subr.mxu0 0.0
    %1634 = vmatpush1.xpose.msra.mxu0 0.0
    %1635 = vmatprep.subr.mxu0 0.0
    %1636 = vmatpush1.xpose.msra.mxu0 0.0
    %1637 = vmatprep.subr.mxu0 0.0
    %1638 = vmatpush1.xpose.msra.mxu0 0.0
    %1639 = vmatprep.subr.mxu0 0.0
    %1640 = vmatpush1.xpose.msra.mxu0 0.0
    %1641 = vmatprep.subr.mxu0 0.0
    %1642 = vmatpush1.xpose.msra.mxu0 0.0
    %1643 = vmatprep.subr.mxu0 0.0
    %1644 = vmatpush1.xpose.msra.mxu0 0.0
    %1645 = vmatprep.subr.mxu0 0.0
    %1646 = vmatpush1.xpose.msra.mxu0 0.0
    %1647 = vmatprep.subr.mxu0 0.0
    %1648 = vmatpush1.xpose.msra.mxu0 0.0
    %1649 = vmatprep.subr.mxu0 0.0
    %1650 = vmatpush1.xpose.msra.mxu0 0.0
    %1651 = vmatprep.subr.mxu0 0.0
    %1652 = vmatpush1.xpose.msra.mxu0 0.0
    %1653 = vmatprep.subr.mxu0 0.0
    %1654 = vmatpush1.xpose.msra.mxu0 0.0
    %1655 = vmatprep.subr.mxu0 0.0
    %1656 = vmatpush1.xpose.msra.mxu0 0.0
    %1657 = vmatprep.subr.mxu0 0.0
    %1658 = vmatpush1.xpose.msra.mxu0 0.0
    %1659 = vmatprep.subr.mxu0 0.0
    %1660 = vmatpush1.xpose.msra.mxu0 0.0
    %1661 = vmatprep.subr.mxu0 0.0
    %1662 = vmatpush1.xpose.msra.mxu0 0.0
    %1663 = vmatprep.subr.mxu0 0.0
    %1664 = vmatpush1.xpose.msra.mxu0 0.0
    %1665 = vmatprep.subr.mxu0 0.0
    %1666 = vmatpush1.xpose.msra.mxu0 0.0
    %1667 = vmatprep.subr.mxu0 0.0
    %1668 = vmatpush1.xpose.msra.mxu0 0.0
    %1669 = vmatprep.subr.mxu0 0.0
    %1670 = vmatpush1.xpose.msra.mxu0 0.0
    %1671 = vmatprep.mubr.f32.mxu0 0.0
    %1672 = vmatmul.mubr.f32.gmra.mrb[0].mxu0 %v1599
    %v1673 = vpop.f32.mrb[0].mxu0
    %v1674 = vadd.f32 %v1341, %v1673
    %v1675 = vpop.f32.mrb[0].mxu0
    %1676 = vmatprep.mubr.f32.mxu0 0.0
    %1677 = vmatmul.mubr.f32.gmra.mrb[0].mxu0 %v1601
    %v1678 = vpop.f32.mrb[0].mxu0
    %v1679 = vadd.f32 %v1342, %v1678
    %v1680 = vpop.f32.mrb[0].mxu0
    %1681 = vdwg.mxu0
    %v1682 = vsel %vm562, %v1425, -inf
    %1683 = vmax.xlane.f32.xlu0 %v1682
    %v1684 = vpop.xlane.xlu0 %1683
    %v1685 = vsel %vm562, %v1430, -inf
    %1686 = vmax.xlane.f32.xlu0 %v1685
    %v1687 = vpop.xlane.xlu0 %1686
    %v1688 = vsel %vm562, %v1508, -inf
    %1689 = vmax.xlane.f32.xlu0 %v1688
    %v1690 = vpop.xlane.xlu0 %1689
    %v1691 = vsel %vm562, %v1513, -inf
    %1692 = vmax.xlane.f32.xlu0 %v1691
    %v1693 = vpop.xlane.xlu0 %1692
    %v1694 = vsel %vm562, %v1591, -inf
    %1695 = vmax.xlane.f32.xlu0 %v1694
    %v1696 = vpop.xlane.xlu0 %1695
    %v1697 = vsel %vm562, %v1596, -inf
    %1698 = vmax.xlane.f32.xlu0 %v1697
    %v1699 = vpop.xlane.xlu0 %1698
    %v1700 = vsel %vm562, %v1674, -inf
    %1701 = vmax.xlane.f32.xlu0 %v1700
    %v1702 = vpop.xlane.xlu0 %1701
    %v1703 = vsel %vm562, %v1679, -inf
    %1704 = vmax.xlane.f32.xlu0 %v1703
    %v1705 = vpop.xlane.xlu0 %1704
    %v1706 = vsub.f32 %v1425, %v1684
    %v1707 = vsub.f32 %v1430, %v1687
    %v1708 = vsub.f32 %v1508, %v1690
    %v1709 = vsub.f32 %v1513, %v1693
    %v1710 = vsub.f32 %v1591, %v1696
    %v1711 = vsub.f32 %v1596, %v1699
    %v1712 = vsub.f32 %v1674, %v1702
    %v1713 = vsub.f32 %v1679, %v1705
    %v1714 = vmul.f32 %v1706, 1.442695
    %v1715 = vpow.pop %v1714
    %v1716 = vmul.f32 %v1707, 1.442695
    %v1717 = vpow.pop %v1716
    %v1718 = vmul.f32 %v1708, 1.442695
    %v1719 = vpow.pop %v1718
    %v1720 = vmul.f32 %v1709, 1.442695
    %v1721 = vpow.pop %v1720
    %v1722 = vmul.f32 %v1710, 1.442695
    %v1723 = vpow.pop %v1722
    %v1724 = vmul.f32 %v1711, 1.442695
    %v1725 = vpow.pop %v1724
    %v1726 = vmul.f32 %v1712, 1.442695
    %v1727 = vpow.pop %v1726
    %v1728 = vmul.f32 %v1713, 1.442695
    %v1729 = vpow.pop %v1728
    %1730 = vrot.lane.b32.xlu0 %v1305, 96
    %v1731 = vpop.permute.xlu0 %1730
    %1732 = vrot.lane.b32.xlu0 %v1310, 96
    %v1733 = vpop.permute.xlu0 %1732
    %v1737 = vsel %vm562, %v1715, 0
    %v1740 = vsel %vm562, %v1717, 0
    %1742 = vmatprep.subr.mxu0 0.0
    %1743 = vmatpush1.msra.mxu0 %v1731
    %1744 = vmatprep.subr.mxu0 0.0
    %1745 = vmatpush1.msra.mxu0 %v1733
    %1746 = vmatprep.subr.mxu0 0.0
    %1747 = vmatpush1.msra.mxu0 0.0
    %1748 = vmatprep.subr.mxu0 0.0
    %1749 = vmatpush1.msra.mxu0 0.0
    %1750 = vmatprep.subr.mxu0 0.0
    %1751 = vmatpush1.msra.mxu0 0.0
    %1752 = vmatprep.subr.mxu0 0.0
    %1753 = vmatpush1.msra.mxu0 0.0
    %1754 = vmatprep.subr.mxu0 0.0
    %1755 = vmatpush1.msra.mxu0 0.0
    %1756 = vmatprep.subr.mxu0 0.0
    %1757 = vmatpush1.msra.mxu0 0.0
    %1758 = vmatprep.subr.mxu0 0.0
    %1759 = vmatpush1.msra.mxu0 0.0
    %1760 = vmatprep.subr.mxu0 0.0
    %1761 = vmatpush1.msra.mxu0 0.0
    %1762 = vmatprep.subr.mxu0 0.0
    %1763 = vmatpush1.msra.mxu0 0.0
    %1764 = vmatprep.subr.mxu0 0.0
    %1765 = vmatpush1.msra.mxu0 0.0
    %1766 = vmatprep.subr.mxu0 0.0
    %1767 = vmatpush1.msra.mxu0 0.0
    %1768 = vmatprep.subr.mxu0 0.0
    %1769 = vmatpush1.msra.mxu0 0.0
    %1770 = vmatprep.subr.mxu0 0.0
    %1771 = vmatpush1.msra.mxu0 0.0
    %1772 = vmatprep.subr.mxu0 0.0
    %1773 = vmatpush1.msra.mxu0 0.0
    %1774 = vmatprep.subr.mxu0 0.0
    %1775 = vmatpush1.msra.mxu0 0.0
    %1776 = vmatprep.subr.mxu0 0.0
    %1777 = vmatpush1.msra.mxu0 0.0
    %1778 = vmatprep.subr.mxu0 0.0
    %1779 = vmatpush1.msra.mxu0 0.0
    %1780 = vmatprep.subr.mxu0 0.0
    %1781 = vmatpush1.msra.mxu0 0.0
    %1782 = vmatprep.subr.mxu0 0.0
    %1783 = vmatpush1.msra.mxu0 0.0
    %1784 = vmatprep.subr.mxu0 0.0
    %1785 = vmatpush1.msra.mxu0 0.0
    %1786 = vmatprep.subr.mxu0 0.0
    %1787 = vmatpush1.msra.mxu0 0.0
    %1788 = vmatprep.subr.mxu0 0.0
    %1789 = vmatpush1.msra.mxu0 0.0
    %1790 = vmatprep.subr.mxu0 0.0
    %1791 = vmatpush1.msra.mxu0 0.0
    %1792 = vmatprep.subr.mxu0 0.0
    %1793 = vmatpush1.msra.mxu0 0.0
    %1794 = vmatprep.subr.mxu0 0.0
    %1795 = vmatpush1.msra.mxu0 0.0
    %1796 = vmatprep.subr.mxu0 0.0
    %1797 = vmatpush1.msra.mxu0 0.0
    %1798 = vmatprep.subr.mxu0 0.0
    %1799 = vmatpush1.msra.mxu0 0.0
    %1800 = vmatprep.subr.mxu0 0.0
    %1801 = vmatpush1.msra.mxu0 0.0
    %1802 = vmatprep.subr.mxu0 0.0
    %1803 = vmatpush1.msra.mxu0 0.0
    %1804 = vmatprep.subr.mxu0 0.0
    %1805 = vmatpush1.msra.mxu0 0.0
    %1806 = vmatprep.mubr.f32.mxu0 0.0
    %1807 = vmatmul.mubr.f32.gmra.mrb[0].mxu0 %v1737
    %v1808 = vpop.f32.mrb[0].mxu0
    %v1809 = vadd.f32 0.0, %v1808
    %v1810 = vpop.f32.mrb[0].mxu0
    %1811 = vmatprep.mubr.f32.mxu0 0.0
    %1812 = vmatmul.mubr.f32.gmra.mrb[0].mxu0 %v1740
    %v1813 = vpop.f32.mrb[0].mxu0
    %v1814 = vadd.f32 0.0, %v1813
    %v1815 = vpop.f32.mrb[0].mxu0
    %1816 = vdwg.mxu0
    %1817 = vrot.lane.b32.xlu0 %v1330, 96
    %v1818 = vpop.permute.xlu0 %1817
    %1819 = vrot.lane.b32.xlu0 %v1332, 96
    %v1820 = vpop.permute.xlu0 %1819
    %v1824 = vsel %vm562, %v1719, 0
    %v1827 = vsel %vm562, %v1721, 0
    %1829 = vmatprep.subr.mxu0 0.0
    %1830 = vmatpush1.msra.mxu0 %v1818
    %1831 = vmatprep.subr.mxu0 0.0
    %1832 = vmatpush1.msra.mxu0 %v1820
    %1833 = vmatprep.subr.mxu0 0.0
    %1834 = vmatpush1.msra.mxu0 0.0
    %1835 = vmatprep.subr.mxu0 0.0
    %1836 = vmatpush1.msra.mxu0 0.0
    %1837 = vmatprep.subr.mxu0 0.0
    %1838 = vmatpush1.msra.mxu0 0.0
    %1839 = vmatprep.subr.mxu0 0.0
    %1840 = vmatpush1.msra.mxu0 0.0
    %1841 = vmatprep.subr.mxu0 0.0
    %1842 = vmatpush1.msra.mxu0 0.0
    %1843 = vmatprep.subr.mxu0 0.0
    %1844 = vmatpush1.msra.mxu0 0.0
    %1845 = vmatprep.subr.mxu0 0.0
    %1846 = vmatpush1.msra.mxu0 0.0
    %1847 = vmatprep.subr.mxu0 0.0
    %1848 = vmatpush1.msra.mxu0 0.0
    %1849 = vmatprep.subr.mxu0 0.0
    %1850 = vmatpush1.msra.mxu0 0.0
    %1851 = vmatprep.subr.mxu0 0.0
    %1852 = vmatpush1.msra.mxu0 0.0
    %1853 = vmatprep.subr.mxu0 0.0
    %1854 = vmatpush1.msra.mxu0 0.0
    %1855 = vmatprep.subr.mxu0 0.0
    %1856 = vmatpush1.msra.mxu0 0.0
    %1857 = vmatprep.subr.mxu0 0.0
    %1858 = vmatpush1.msra.mxu0 0.0
    %1859 = vmatprep.subr.mxu0 0.0
    %1860 = vmatpush1.msra.mxu0 0.0
    %1861 = vmatprep.subr.mxu0 0.0
    %1862 = vmatpush1.msra.mxu0 0.0
    %1863 = vmatprep.subr.mxu0 0.0
    %1864 = vmatpush1.msra.mxu0 0.0
    %1865 = vmatprep.subr.mxu0 0.0
    %1866 = vmatpush1.msra.mxu0 0.0
    %1867 = vmatprep.subr.mxu0 0.0
    %1868 = vmatpush1.msra.mxu0 0.0
    %1869 = vmatprep.subr.mxu0 0.0
    %1870 = vmatpush1.msra.mxu0 0.0
    %1871 = vmatprep.subr.mxu0 0.0
    %1872 = vmatpush1.msra.mxu0 0.0
    %1873 = vmatprep.subr.mxu0 0.0
    %1874 = vmatpush1.msra.mxu0 0.0
    %1875 = vmatprep.subr.mxu0 0.0
    %1876 = vmatpush1.msra.mxu0 0.0
    %1877 = vmatprep.subr.mxu0 0.0
    %1878 = vmatpush1.msra.mxu0 0.0
    %1879 = vmatprep.subr.mxu0 0.0
    %1880 = vmatpush1.msra.mxu0 0.0
    %1881 = vmatprep.subr.mxu0 0.0
    %1882 = vmatpush1.msra.mxu0 0.0
    %1883 = vmatprep.subr.mxu0 0.0
    %1884 = vmatpush1.msra.mxu0 0.0
    %1885 = vmatprep.subr.mxu0 0.0
    %1886 = vmatpush1.msra.mxu0 0.0
    %1887 = vmatprep.subr.mxu0 0.0
    %1888 = vmatpush1.msra.mxu0 0.0
    %1889 = vmatprep.subr.mxu0 0.0
    %1890 = vmatpush1.msra.mxu0 0.0
    %1891 = vmatprep.subr.mxu0 0.0
    %1892 = vmatpush1.msra.mxu0 0.0
    %1893 = vmatprep.mubr.f32.mxu0 0.0
    %1894 = vmatmul.mubr.f32.gmra.mrb[0].mxu0 %v1824
    %v1895 = vpop.f32.mrb[0].mxu0
    %v1896 = vadd.f32 0.0, %v1895
    %v1897 = vpop.f32.mrb[0].mxu0
    %1898 = vmatprep.mubr.f32.mxu0 0.0
    %1899 = vmatmul.mubr.f32.gmra.mrb[0].mxu0 %v1827
    %v1900 = vpop.f32.mrb[0].mxu0
    %v1901 = vadd.f32 0.0, %v1900
    %v1902 = vpop.f32.mrb[0].mxu0
    %1903 = vdwg.mxu0
    %1904 = vrot.lane.b32.xlu0 %v1334, 96
    %v1905 = vpop.permute.xlu0 %1904
    %1906 = vrot.lane.b32.xlu0 %v1336, 96
    %v1907 = vpop.permute.xlu0 %1906
    %v1911 = vsel %vm562, %v1723, 0
    %v1914 = vsel %vm562, %v1725, 0
    %1916 = vmatprep.subr.mxu0 0.0
    %1917 = vmatpush1.msra.mxu0 %v1905
    %1918 = vmatprep.subr.mxu0 0.0
    %1919 = vmatpush1.msra.mxu0 %v1907
    %1920 = vmatprep.subr.mxu0 0.0
    %1921 = vmatpush1.msra.mxu0 0.0
    %1922 = vmatprep.subr.mxu0 0.0
    %1923 = vmatpush1.msra.mxu0 0.0
    %1924 = vmatprep.subr.mxu0 0.0
    %1925 = vmatpush1.msra.mxu0 0.0
    %1926 = vmatprep.subr.mxu0 0.0
    %1927 = vmatpush1.msra.mxu0 0.0
    %1928 = vmatprep.subr.mxu0 0.0
    %1929 = vmatpush1.msra.mxu0 0.0
    %1930 = vmatprep.subr.mxu0 0.0
    %1931 = vmatpush1.msra.mxu0 0.0
    %1932 = vmatprep.subr.mxu0 0.0
    %1933 = vmatpush1.msra.mxu0 0.0
    %1934 = vmatprep.subr.mxu0 0.0
    %1935 = vmatpush1.msra.mxu0 0.0
    %1936 = vmatprep.subr.mxu0 0.0
    %1937 = vmatpush1.msra.mxu0 0.0
    %1938 = vmatprep.subr.mxu0 0.0
    %1939 = vmatpush1.msra.mxu0 0.0
    %1940 = vmatprep.subr.mxu0 0.0
    %1941 = vmatpush1.msra.mxu0 0.0
    %1942 = vmatprep.subr.mxu0 0.0
    %1943 = vmatpush1.msra.mxu0 0.0
    %1944 = vmatprep.subr.mxu0 0.0
    %1945 = vmatpush1.msra.mxu0 0.0
    %1946 = vmatprep.subr.mxu0 0.0
    %1947 = vmatpush1.msra.mxu0 0.0
    %1948 = vmatprep.subr.mxu0 0.0
    %1949 = vmatpush1.msra.mxu0 0.0
    %1950 = vmatprep.subr.mxu0 0.0
    %1951 = vmatpush1.msra.mxu0 0.0
    %1952 = vmatprep.subr.mxu0 0.0
    %1953 = vmatpush1.msra.mxu0 0.0
    %1954 = vmatprep.subr.mxu0 0.0
    %1955 = vmatpush1.msra.mxu0 0.0
    %1956 = vmatprep.subr.mxu0 0.0
    %1957 = vmatpush1.msra.mxu0 0.0
    %1958 = vmatprep.subr.mxu0 0.0
    %1959 = vmatpush1.msra.mxu0 0.0
    %1960 = vmatprep.subr.mxu0 0.0
    %1961 = vmatpush1.msra.mxu0 0.0
    %1962 = vmatprep.subr.mxu0 0.0
    %1963 = vmatpush1.msra.mxu0 0.0
    %1964 = vmatprep.subr.mxu0 0.0
    %1965 = vmatpush1.msra.mxu0 0.0
    %1966 = vmatprep.subr.mxu0 0.0
    %1967 = vmatpush1.msra.mxu0 0.0
    %1968 = vmatprep.subr.mxu0 0.0
    %1969 = vmatpush1.msra.mxu0 0.0
    %1970 = vmatprep.subr.mxu0 0.0
    %1971 = vmatpush1.msra.mxu0 0.0
    %1972 = vmatprep.subr.mxu0 0.0
    %1973 = vmatpush1.msra.mxu0 0.0
    %1974 = vmatprep.subr.mxu0 0.0
    %1975 = vmatpush1.msra.mxu0 0.0
    %1976 = vmatprep.subr.mxu0 0.0
    %1977 = vmatpush1.msra.mxu0 0.0
    %1978 = vmatprep.subr.mxu0 0.0
    %1979 = vmatpush1.msra.mxu0 0.0
    %1980 = vmatprep.mubr.f32.mxu0 0.0
    %1981 = vmatmul.mubr.f32.gmra.mrb[0].mxu0 %v1911
    %v1982 = vpop.f32.mrb[0].mxu0
    %v1983 = vadd.f32 0.0, %v1982
    %v1984 = vpop.f32.mrb[0].mxu0
    %1985 = vmatprep.mubr.f32.mxu0 0.0
    %1986 = vmatmul.mubr.f32.gmra.mrb[0].mxu0 %v1914
    %v1987 = vpop.f32.mrb[0].mxu0
    %v1988 = vadd.f32 0.0, %v1987
    %v1989 = vpop.f32.mrb[0].mxu0
    %1990 = vdwg.mxu0
    %1991 = vrot.lane.b32.xlu0 %v1338, 96
    %v1992 = vpop.permute.xlu0 %1991
    %1993 = vrot.lane.b32.xlu0 %v1340, 96
    %v1994 = vpop.permute.xlu0 %1993
    %v1998 = vsel %vm562, %v1727, 0
    %v2001 = vsel %vm562, %v1729, 0
    %2003 = vmatprep.subr.mxu0 0.0
    %2004 = vmatpush1.msra.mxu0 %v1992
    %2005 = vmatprep.subr.mxu0 0.0
    %2006 = vmatpush1.msra.mxu0 %v1994
    %2007 = vmatprep.subr.mxu0 0.0
    %2008 = vmatpush1.msra.mxu0 0.0
    %2009 = vmatprep.subr.mxu0 0.0
    %2010 = vmatpush1.msra.mxu0 0.0
    %2011 = vmatprep.subr.mxu0 0.0
    %2012 = vmatpush1.msra.mxu0 0.0
    %2013 = vmatprep.subr.mxu0 0.0
    %2014 = vmatpush1.msra.mxu0 0.0
    %2015 = vmatprep.subr.mxu0 0.0
    %2016 = vmatpush1.msra.mxu0 0.0
    %2017 = vmatprep.subr.mxu0 0.0
    %2018 = vmatpush1.msra.mxu0 0.0
    %2019 = vmatprep.subr.mxu0 0.0
    %2020 = vmatpush1.msra.mxu0 0.0
    %2021 = vmatprep.subr.mxu0 0.0
    %2022 = vmatpush1.msra.mxu0 0.0
    %2023 = vmatprep.subr.mxu0 0.0
    %2024 = vmatpush1.msra.mxu0 0.0
    %2025 = vmatprep.subr.mxu0 0.0
    %2026 = vmatpush1.msra.mxu0 0.0
    %2027 = vmatprep.subr.mxu0 0.0
    %2028 = vmatpush1.msra.mxu0 0.0
    %2029 = vmatprep.subr.mxu0 0.0
    %2030 = vmatpush1.msra.mxu0 0.0
    %2031 = vmatprep.subr.mxu0 0.0
    %2032 = vmatpush1.msra.mxu0 0.0
    %2033 = vmatprep.subr.mxu0 0.0
    %2034 = vmatpush1.msra.mxu0 0.0
    %2035 = vmatprep.subr.mxu0 0.0
    %2036 = vmatpush1.msra.mxu0 0.0
    %2037 = vmatprep.subr.mxu0 0.0
    %2038 = vmatpush1.msra.mxu0 0.0
    %2039 = vmatprep.subr.mxu0 0.0
    %2040 = vmatpush1.msra.mxu0 0.0
    %2041 = vmatprep.subr.mxu0 0.0
    %2042 = vmatpush1.msra.mxu0 0.0
    %2043 = vmatprep.subr.mxu0 0.0
    %2044 = vmatpush1.msra.mxu0 0.0
    %2045 = vmatprep.subr.mxu0 0.0
    %2046 = vmatpush1.msra.mxu0 0.0
    %2047 = vmatprep.subr.mxu0 0.0
    %2048 = vmatpush1.msra.mxu0 0.0
    %2049 = vmatprep.subr.mxu0 0.0
    %2050 = vmatpush1.msra.mxu0 0.0
    %2051 = vmatprep.subr.mxu0 0.0
    %2052 = vmatpush1.msra.mxu0 0.0
    %2053 = vmatprep.subr.mxu0 0.0
    %2054 = vmatpush1.msra.mxu0 0.0
    %2055 = vmatprep.subr.mxu0 0.0
    %2056 = vmatpush1.msra.mxu0 0.0
    %2057 = vmatprep.subr.mxu0 0.0
    %2058 = vmatpush1.msra.mxu0 0.0
    %2059 = vmatprep.subr.mxu0 0.0
    %2060 = vmatpush1.msra.mxu0 0.0
    %2061 = vmatprep.subr.mxu0 0.0
    %2062 = vmatpush1.msra.mxu0 0.0
    %2063 = vmatprep.subr.mxu0 0.0
    %2064 = vmatpush1.msra.mxu0 0.0
    %2065 = vmatprep.subr.mxu0 0.0
    %2066 = vmatpush1.msra.mxu0 0.0
    %2067 = vmatprep.mubr.f32.mxu0 0.0
    %2068 = vmatmul.mubr.f32.gmra.mrb[0].mxu0 %v1998
    %v2069 = vpop.f32.mrb[0].mxu0
    %v2070 = vadd.f32 0.0, %v2069
    %v2071 = vpop.f32.mrb[0].mxu0
    %2072 = vmatprep.mubr.f32.mxu0 0.0
    %2073 = vmatmul.mubr.f32.gmra.mrb[0].mxu0 %v2001
    %v2074 = vpop.f32.mrb[0].mxu0
    %v2075 = vadd.f32 0.0, %v2074
    %v2076 = vpop.f32.mrb[0].mxu0
    %2077 = vdwg.mxu0
    %v2078 = vsel %vm562, %v1715, 0.0
    %2079 = vadd.xlane.f32.xlu0 %v2078
    %v2080 = vpop.xlane.xlu0 %2079
    %v2081 = vsel %vm562, %v1717, 0.0
    %2082 = vadd.xlane.f32.xlu0 %v2081
    %v2083 = vpop.xlane.xlu0 %2082
    %v2084 = vsel %vm562, %v1719, 0.0
    %2085 = vadd.xlane.f32.xlu0 %v2084
    %v2086 = vpop.xlane.xlu0 %2085
    %v2087 = vsel %vm562, %v1721, 0.0
    %2088 = vadd.xlane.f32.xlu0 %v2087
    %v2089 = vpop.xlane.xlu0 %2088
    %v2090 = vsel %vm562, %v1723, 0.0
    %2091 = vadd.xlane.f32.xlu0 %v2090
    %v2092 = vpop.xlane.xlu0 %2091
    %v2093 = vsel %vm562, %v1725, 0.0
    %2094 = vadd.xlane.f32.xlu0 %v2093
    %v2095 = vpop.xlane.xlu0 %2094
    %v2096 = vsel %vm562, %v1727, 0.0
    %2097 = vadd.xlane.f32.xlu0 %v2096
    %v2098 = vpop.xlane.xlu0 %2097
    %v2099 = vsel %vm562, %v1729, 0.0
    %2100 = vadd.xlane.f32.xlu0 %v2099
    %v2101 = vpop.xlane.xlu0 %2100
    %v2102 = vrcp.pop %v2080
    %v2103 = vmul.f32 %v1809, %v2102
    %v2104 = vrcp.pop %v2083
    %v2105 = vmul.f32 %v1814, %v2104
    %v2106 = vrcp.pop %v2086
    %v2107 = vmul.f32 %v1896, %v2106
    %v2108 = vrcp.pop %v2089
    %v2109 = vmul.f32 %v1901, %v2108
    %v2110 = vrcp.pop %v2092
    %v2111 = vmul.f32 %v1983, %v2110
    %v2112 = vrcp.pop %v2095
    %v2113 = vmul.f32 %v1988, %v2112
    %v2114 = vrcp.pop %v2098
    %v2115 = vmul.f32 %v2070, %v2114
    %v2116 = vrcp.pop %v2101
    %v2117 = vmul.f32 %v2075, %v2116
    %2120 = vrot.lane.b32.xlu0 %v2107, 8
    %v2121 = vpop.permute.xlu0 %2120
    %2122 = vrot.lane.b32.xlu0 %v2109, 8
    %v2123 = vpop.permute.xlu0 %2122
    %2128 = vrot.lane.b32.xlu0 %v2111, 16
    %v2129 = vpop.permute.xlu0 %2128
    %2130 = vrot.lane.b32.xlu0 %v2113, 16
    %v2131 = vpop.permute.xlu0 %2130
    %2136 = vrot.lane.b32.xlu0 %v2115, 24
    %v2137 = vpop.permute.xlu0 %2136
    %2138 = vrot.lane.b32.xlu0 %v2117, 24
    %v2139 = vpop.permute.xlu0 %2138
    %v2142 = vsel %vm217, %v2103, %v2121
    %v2143 = vsel %vm217, %v2105, %v2123
    %v2144 = vsel %vm562, %v2142, %v2129
    %v2145 = vsel %vm562, %v2143, %v2131
    %v2146 = vsel %vm1027, %v2144, %v2137
    %v2147 = vsel %vm1027, %v2145, %v2139
    %v2149 = vlaneseq
    %v2150 = vshrl.u32 %v2149, 7
    %v2151 = vsub.s32 0, %v2150
    %v2152 = vrot.slane %v1349, %v2151
    %v2155 = vsel %vm110, %v2146, 0
    %v2158 = vsel %vm110, %v2147, 0
    %2160 = vmatprep.subr.mxu0 0.0
    %2161 = vmatpush1.msra.mxu0 %v1344
    %2162 = vmatprep.subr.mxu0 0.0
    %2163 = vmatpush1.msra.mxu0 %v1345
    %2164 = vmatprep.subr.mxu0 0.0
    %2165 = vmatpush1.msra.mxu0 %v1346
    %2166 = vmatprep.subr.mxu0 0.0
    %2167 = vmatpush1.msra.mxu0 %v1347
    %2168 = vmatprep.subr.mxu0 0.0
    %2169 = vmatpush1.msra.mxu0 0.0
    %2170 = vmatprep.subr.mxu0 0.0
    %2171 = vmatpush1.msra.mxu0 0.0
    %2172 = vmatprep.subr.mxu0 0.0
    %2173 = vmatpush1.msra.mxu0 0.0
    %2174 = vmatprep.subr.mxu0 0.0
    %2175 = vmatpush1.msra.mxu0 0.0
    %2176 = vmatprep.subr.mxu0 0.0
    %2177 = vmatpush1.msra.mxu0 0.0
    %2178 = vmatprep.subr.mxu0 0.0
    %2179 = vmatpush1.msra.mxu0 0.0
    %2180 = vmatprep.subr.mxu0 0.0
    %2181 = vmatpush1.msra.mxu0 0.0
    %2182 = vmatprep.subr.mxu0 0.0
    %2183 = vmatpush1.msra.mxu0 0.0
    %2184 = vmatprep.subr.mxu0 0.0
    %2185 = vmatpush1.msra.mxu0 0.0
    %2186 = vmatprep.subr.mxu0 0.0
    %2187 = vmatpush1.msra.mxu0 0.0
    %2188 = vmatprep.subr.mxu0 0.0
    %2189 = vmatpush1.msra.mxu0 0.0
    %2190 = vmatprep.subr.mxu0 0.0
    %2191 = vmatpush1.msra.mxu0 0.0
    %2192 = vmatprep.subr.mxu0 0.0
    %2193 = vmatpush1.msra.mxu0 0.0
    %2194 = vmatprep.subr.mxu0 0.0
    %2195 = vmatpush1.msra.mxu0 0.0
    %2196 = vmatprep.subr.mxu0 0.0
    %2197 = vmatpush1.msra.mxu0 0.0
    %2198 = vmatprep.subr.mxu0 0.0
    %2199 = vmatpush1.msra.mxu0 0.0
    %2200 = vmatprep.subr.mxu0 0.0
    %2201 = vmatpush1.msra.mxu0 0.0
    %2202 = vmatprep.subr.mxu0 0.0
    %2203 = vmatpush1.msra.mxu0 0.0
    %2204 = vmatprep.subr.mxu0 0.0
    %2205 = vmatpush1.msra.mxu0 0.0
    %2206 = vmatprep.subr.mxu0 0.0
    %2207 = vmatpush1.msra.mxu0 0.0
    %2208 = vmatprep.subr.mxu0 0.0
    %2209 = vmatpush1.msra.mxu0 0.0
    %2210 = vmatprep.subr.mxu0 0.0
    %2211 = vmatpush1.msra.mxu0 0.0
    %2212 = vmatprep.subr.mxu0 0.0
    %2213 = vmatpush1.msra.mxu0 0.0
    %2214 = vmatprep.subr.mxu0 0.0
    %2215 = vmatpush1.msra.mxu0 0.0
    %2216 = vmatprep.subr.mxu0 0.0
    %2217 = vmatpush1.msra.mxu0 0.0
    %2218 = vmatprep.subr.mxu0 0.0
    %2219 = vmatpush1.msra.mxu0 0.0
    %2220 = vmatprep.subr.mxu0 0.0
    %2221 = vmatpush1.msra.mxu0 0.0
    %2222 = vmatprep.subr.mxu0 0.0
    %2223 = vmatpush1.msra.mxu0 0.0
    %2224 = vmatprep.mubr.f32.mxu0 0.0
    %2225 = vmatmul.mubr.f32.gmra.mrb[0].mxu0 %v2155
    %v2226 = vpop.f32.mrb[0].mxu0
    %v2227 = vadd.f32 %v2152, %v2226
    %v2228 = vpop.f32.mrb[0].mxu0
    %2229 = vmatprep.mubr.f32.mxu0 0.0
    %2230 = vmatmul.mubr.f32.gmra.mrb[0].mxu0 %v2158
    %v2231 = vpop.f32.mrb[0].mxu0
    %v2232 = vadd.f32 %v2152, %v2231
    %v2233 = vpop.f32.mrb[0].mxu0
    %2234 = vdwg.mxu0
    %v2235 = vadd.f32 %v1117, %v2227
    %v2236 = vadd.f32 %v1118, %v2232
    %v2237 = vld [vmem:[%s8] sm:$0xff]
    %v2238 = vld [vmem:[%s8 + $0x8] sm:$0xff]
    %v2239 = vld [vmem:[%s8 + $0x10] sm:$0xff]
    %v2240 = vld [vmem:[%s8 + $0x18] sm:$0xff]
    %v2241 = vld [vmem:[#allocation8] sm:$0x1]
    %v2243 = vlaneseq
    %v2244 = vshrl.u32 %v2243, 7
    %v2245 = vsub.s32 0, %v2244
    %v2246 = vrot.slane %v2241, %v2245
    %v2249 = vsel %vm110, %v2235, 0
    %v2252 = vsel %vm110, %v2236, 0
    %2254 = vmatprep.subr.mxu0 0.0
    %2255 = vmatpush1.msra.mxu0 %v2237
    %2256 = vmatprep.subr.mxu0 0.0
    %2257 = vmatpush1.msra.mxu0 %v2238
    %2258 = vmatprep.subr.mxu0 0.0
    %2259 = vmatpush1.msra.mxu0 %v2239
    %2260 = vmatprep.subr.mxu0 0.0
    %2261 = vmatpush1.msra.mxu0 %v2240
    %2262 = vmatprep.subr.mxu0 0.0
    %2263 = vmatpush1.msra.mxu0 0.0
    %2264 = vmatprep.subr.mxu0 0.0
    %2265 = vmatpush1.msra.mxu0 0.0
    %2266 = vmatprep.subr.mxu0 0.0
    %2267 = vmatpush1.msra.mxu0 0.0
    %2268 = vmatprep.subr.mxu0 0.0
    %2269 = vmatpush1.msra.mxu0 0.0
    %2270 = vmatprep.subr.mxu0 0.0
    %2271 = vmatpush1.msra.mxu0 0.0
    %2272 = vmatprep.subr.mxu0 0.0
    %2273 = vmatpush1.msra.mxu0 0.0
    %2274 = vmatprep.subr.mxu0 0.0
    %2275 = vmatpush1.msra.mxu0 0.0
    %2276 = vmatprep.subr.mxu0 0.0
    %2277 = vmatpush1.msra.mxu0 0.0
    %2278 = vmatprep.subr.mxu0 0.0
    %2279 = vmatpush1.msra.mxu0 0.0
    %2280 = vmatprep.subr.mxu0 0.0
    %2281 = vmatpush1.msra.mxu0 0.0
    %2282 = vmatprep.subr.mxu0 0.0
    %2283 = vmatpush1.msra.mxu0 0.0
    %2284 = vmatprep.subr.mxu0 0.0
    %2285 = vmatpush1.msra.mxu0 0.0
    %2286 = vmatprep.subr.mxu0 0.0
    %2287 = vmatpush1.msra.mxu0 0.0
    %2288 = vmatprep.subr.mxu0 0.0
    %2289 = vmatpush1.msra.mxu0 0.0
    %2290 = vmatprep.subr.mxu0 0.0
    %2291 = vmatpush1.msra.mxu0 0.0
    %2292 = vmatprep.subr.mxu0 0.0
    %2293 = vmatpush1.msra.mxu0 0.0
    %2294 = vmatprep.subr.mxu0 0.0
    %2295 = vmatpush1.msra.mxu0 0.0
    %2296 = vmatprep.subr.mxu0 0.0
    %2297 = vmatpush1.msra.mxu0 0.0
    %2298 = vmatprep.subr.mxu0 0.0
    %2299 = vmatpush1.msra.mxu0 0.0
    %2300 = vmatprep.subr.mxu0 0.0
    %2301 = vmatpush1.msra.mxu0 0.0
    %2302 = vmatprep.subr.mxu0 0.0
    %2303 = vmatpush1.msra.mxu0 0.0
    %2304 = vmatprep.subr.mxu0 0.0
    %2305 = vmatpush1.msra.mxu0 0.0
    %2306 = vmatprep.subr.mxu0 0.0
    %2307 = vmatpush1.msra.mxu0 0.0
    %2308 = vmatprep.subr.mxu0 0.0
    %2309 = vmatpush1.msra.mxu0 0.0
    %2310 = vmatprep.subr.mxu0 0.0
    %2311 = vmatpush1.msra.mxu0 0.0
    %2312 = vmatprep.subr.mxu0 0.0
    %2313 = vmatpush1.msra.mxu0 0.0
    %2314 = vmatprep.subr.mxu0 0.0
    %2315 = vmatpush1.msra.mxu0 0.0
    %2316 = vmatprep.subr.mxu0 0.0
    %2317 = vmatpush1.msra.mxu0 0.0
    %2318 = vmatprep.mubr.f32.mxu0 0.0
    %2319 = vmatmul.mubr.f32.gmra.mrb[0].mxu0 %v2249
    %v2320 = vpop.f32.mrb[0].mxu0
    %v2321 = vadd.f32 %v2246, %v2320
    %v2322 = vpop.f32.mrb[0].mxu0
    %2323 = vmatprep.mubr.f32.mxu0 0.0
    %2324 = vmatmul.mubr.f32.gmra.mrb[0].mxu0 %v2252
    %v2325 = vpop.f32.mrb[0].mxu0
    %v2326 = vadd.f32 %v2246, %v2325
    %v2327 = vpop.f32.mrb[0].mxu0
    %2328 = vdwg.mxu0
    %v2329 = vld [vmem:[%s10] sm:$0xff]
    %v2330 = vld [vmem:[%s10 + $0x8] sm:$0xff]
    %v2331 = vld [vmem:[%s11] sm:$0x1]
    %v2333 = vlaneseq
    %v2334 = vshrl.u32 %v2333, 7
    %v2335 = vsub.s32 0, %v2334
    %v2336 = vrot.slane %v2331, %v2335
    %v2339 = vsel %vm562, %v2321, 0
    %v2342 = vsel %vm562, %v2326, 0
    %2344 = vmatprep.subr.mxu0 0.0
    %2345 = vmatpush1.msra.mxu0 %v2329
    %2346 = vmatprep.subr.mxu0 0.0
    %2347 = vmatpush1.msra.mxu0 %v2330
    %2348 = vmatprep.subr.mxu0 0.0
    %2349 = vmatpush1.msra.mxu0 0.0
    %2350 = vmatprep.subr.mxu0 0.0
    %2351 = vmatpush1.msra.mxu0 0.0
    %2352 = vmatprep.subr.mxu0 0.0
    %2353 = vmatpush1.msra.mxu0 0.0
    %2354 = vmatprep.subr.mxu0 0.0
    %2355 = vmatpush1.msra.mxu0 0.0
    %2356 = vmatprep.subr.mxu0 0.0
    %2357 = vmatpush1.msra.mxu0 0.0
    %2358 = vmatprep.subr.mxu0 0.0
    %2359 = vmatpush1.msra.mxu0 0.0
    %2360 = vmatprep.subr.mxu0 0.0
    %2361 = vmatpush1.msra.mxu0 0.0
    %2362 = vmatprep.subr.mxu0 0.0
    %2363 = vmatpush1.msra.mxu0 0.0
    %2364 = vmatprep.subr.mxu0 0.0
    %2365 = vmatpush1.msra.mxu0 0.0
    %2366 = vmatprep.subr.mxu0 0.0
    %2367 = vmatpush1.msra.mxu0 0.0
    %2368 = vmatprep.subr.mxu0 0.0
    %2369 = vmatpush1.msra.mxu0 0.0
    %2370 = vmatprep.subr.mxu0 0.0
    %2371 = vmatpush1.msra.mxu0 0.0
    %2372 = vmatprep.subr.mxu0 0.0
    %2373 = vmatpush1.msra.mxu0 0.0
    %2374 = vmatprep.subr.mxu0 0.0
    %2375 = vmatpush1.msra.mxu0 0.0
    %2376 = vmatprep.subr.mxu0 0.0
    %2377 = vmatpush1.msra.mxu0 0.0
    %2378 = vmatprep.subr.mxu0 0.0
    %2379 = vmatpush1.msra.mxu0 0.0
    %2380 = vmatprep.subr.mxu0 0.0
    %2381 = vmatpush1.msra.mxu0 0.0
    %2382 = vmatprep.subr.mxu0 0.0
    %2383 = vmatpush1.msra.mxu0 0.0
    %2384 = vmatprep.subr.mxu0 0.0
    %2385 = vmatpush1.msra.mxu0 0.0
    %2386 = vmatprep.subr.mxu0 0.0
    %2387 = vmatpush1.msra.mxu0 0.0
    %2388 = vmatprep.subr.mxu0 0.0
    %2389 = vmatpush1.msra.mxu0 0.0
    %2390 = vmatprep.subr.mxu0 0.0
    %2391 = vmatpush1.msra.mxu0 0.0
    %2392 = vmatprep.subr.mxu0 0.0
    %2393 = vmatpush1.msra.mxu0 0.0
    %2394 = vmatprep.subr.mxu0 0.0
    %2395 = vmatpush1.msra.mxu0 0.0
    %2396 = vmatprep.subr.mxu0 0.0
    %2397 = vmatpush1.msra.mxu0 0.0
    %2398 = vmatprep.subr.mxu0 0.0
    %2399 = vmatpush1.msra.mxu0 0.0
    %2400 = vmatprep.subr.mxu0 0.0
    %2401 = vmatpush1.msra.mxu0 0.0
    %2402 = vmatprep.subr.mxu0 0.0
    %2403 = vmatpush1.msra.mxu0 0.0
    %2404 = vmatprep.subr.mxu0 0.0
    %2405 = vmatpush1.msra.mxu0 0.0
    %2406 = vmatprep.subr.mxu0 0.0
    %2407 = vmatpush1.msra.mxu0 0.0
    %2408 = vmatprep.mubr.f32.mxu0 0.0
    %2409 = vmatmul.mubr.f32.gmra.mrb[0].mxu0 %v2339
    %v2410 = vpop.f32.mrb[0].mxu0
    %v2411 = vadd.f32 %v2336, %v2410
    %v2412 = vpop.f32.mrb[0].mxu0
    %2413 = vmatprep.mubr.f32.mxu0 0.0
    %2414 = vmatmul.mubr.f32.gmra.mrb[0].mxu0 %v2342
    %v2415 = vpop.f32.mrb[0].mxu0
    %v2416 = vadd.f32 %v2336, %v2415
    %v2417 = vpop.f32.mrb[0].mxu0
    %2418 = vdwg.mxu0
    %v2419 = vadd.f32 %v2235, %v2411
    %v2420 = vadd.f32 %v2236, %v2416
    %2421 = vst.msk [vmem:[#allocation10] sm:$0xff] %vm110, %v2419
    %2422 = vst.msk [vmem:[#allocation10 + $0x8] sm:$0xff] %vm110, %v2420
    // Predicated region
    $region66: #{transformer_decoder_layer.1} parent=1 // pred_check
      _
    $region67: #{transformer_decoder_layer.1} parent=1 // pred_check_branch
      %2424 = sbr.rel (0) target = $region69
    $region68: #{transformer_decoder_layer.1} parent=1 // pred_region
      %s2426 = ssub.s32 256, 256
      %2427 = vsyncadd [#allocation4], %s2426
      %s2428 = sshll.u32 [#allocation10], 4
      %s2429 = int_to_ptr.vmem [resolvable:$true] %s2428
      %2434 = dma.vmem_to_hbm [thread:$0]  %s2429, 256, %s12, [#allocation4], 128, 128, 8
    $region69: #{transformer_decoder_layer.1} parent=1 // pred_fallthru
      _
    // Predicated region
    $region70: #{transformer_decoder_layer.1} parent=1 // pred_check
      _
    $region71: #{transformer_decoder_layer.1} parent=1 // pred_check_branch
      %2436 = sbr.rel (0) target = $region73
    $region72: #{transformer_decoder_layer.1} parent=1 // pred_region
      %2437 = dma.done [#allocation4], 256
    $region73: #{transformer_decoder_layer.1} parent=1 // pred_fallthru
      _
    %2438 = vsyncpa [#allocation3], 1
    %2439 = vsyncpa [#allocation6], 1
    %2440 = vsyncpa [#allocation9], 1
    %2441 = vsyncpa [#allocation4], 1

</llo_original>
